<compile_context>
chip_gen: v5e
topology: v5e:2x2
jax: 0.10.0
libtpu: 0.0.40
codegen_flags: <defaults>
</compile_context>

<pallas_src>
import functools

import jax
import jax.numpy as jnp
from jax.experimental import pallas as pl
from jax.experimental.pallas import tpu as pltpu


def _round_up(x, m):
    return ((x + m - 1) // m) * m


# ----------------------------------------------------------------------------
# Pallas kernel 1: 1x1 conv (input_proj) as a per-batch (D,C)@(C,HW_tile) matmul
# ----------------------------------------------------------------------------
def _conv1x1_kernel(x_ref, w_ref, b_ref, o_ref):
    # x: (1, C, THW) bf16, w: (D, C) bf16, b: (D, 1) f32 -> o: (1, D, THW) f32
    o_ref[0] = (
        jnp.dot(w_ref[...], x_ref[0], preferred_element_type=jnp.float32)
        + b_ref[...]
    )


def input_proj_conv1x1(x_nchw, w_dc, b):
    """1x1 Conv2d(C_in -> D) without layout transposes.

    x_nchw: (B, C_in, H, W); w_dc: (D, C_in) (PyTorch conv weight layout,
    squeezed); b: (D,).  Returns (B, D, H, W) float32.
    """
    B, C, H, W = x_nchw.shape
    D = w_dc.shape[0]
    HW = H * W

    x = x_nchw.reshape(B, C, HW)

    # Spatial tiling: keep activation tiles modest so DMA is double-buffered
    # and VMEM stays well under the scoped budget even at backbone-scale C.
    if HW <= 512:
        THW = HW
        HWp = HW
    else:
        THW = 512
        HWp = _round_up(HW, THW)
        if HWp != HW:
            x = jnp.pad(x, ((0, 0), (0, 0), (0, HWp - HW)))
    n_hw = HWp // THW

    out = pl.pallas_call(
        _conv1x1_kernel,
        out_shape=jax.ShapeDtypeStruct((B, D, HWp), jnp.float32),
        grid_spec=pltpu.PrefetchScalarGridSpec(
            num_scalar_prefetch=0,
            grid=(B, n_hw),
            in_specs=[
                pl.BlockSpec((1, C, THW), lambda bi, ti: (bi, 0, ti)),
                pl.BlockSpec((D, C), lambda bi, ti: (0, 0)),    # resident weight
                pl.BlockSpec((D, 1), lambda bi, ti: (0, 0)),    # resident bias
            ],
            out_specs=pl.BlockSpec((1, D, THW), lambda bi, ti: (bi, 0, ti)),
        ),
        compiler_params=pltpu.CompilerParams(
            dimension_semantics=("parallel", "parallel"),
            vmem_limit_bytes=32 * 1024 * 1024,
        ),
    )(
        x.astype(jnp.bfloat16),
        w_dc.astype(jnp.bfloat16),
        b.reshape(D, 1).astype(jnp.float32),
    )
    return out[:, :, :HW].reshape(B, D, H, W)


# ----------------------------------------------------------------------------
# Pallas kernel 2: fused per-decoder-layer prediction heads
# ----------------------------------------------------------------------------
def _heads_kernel(
    hs_ref,                     # (1, BQ, D)           bf16
    wcls_ref, bcls_ref,         # (1, D, Cpad) bf16 / (1, 1, Cpad) f32
    w1_ref, b1_ref,             # (1, D, 2D) bf16 / (1, 1, 2D) f32  (sub|obj layer-1)
    sw2_ref, sb2_ref,           # (1, D, D) bf16 / (1, 1, D) f32    (sub layer-2)
    ow2_ref, ob2_ref,           # (1, D, D) bf16 / (1, 1, D) f32    (obj layer-2)
    w3_ref, b3_ref,             # (1, D, 8) bf16 / (1, 1, 8) f32    (sub|obj layer-3)
    out_ref,                    # (1, BQ, Cpad + 8) f32
):
    x = hs_ref[0]                       # (BQ, D) bf16
    bq = x.shape[0]
    d = sw2_ref.shape[1]

    # Fused class heads (obj | verb), zero-padded columns.
    cls = (
        jnp.dot(x, wcls_ref[0], preferred_element_type=jnp.float32)
        + bcls_ref[0]
    )                                   # (BQ, Cpad) f32

    # Fused bbox-MLP layer 1: x @ [sub_w1 | obj_w1].
    h = (
        jnp.dot(x, w1_ref[0], preferred_element_type=jnp.float32)
        + b1_ref[0]
    )
    h = jnp.maximum(h, 0.0).astype(x.dtype)          # (BQ, 2D) bf16
    h_s = h[:, :d]
    h_o = h[:, d:]

    # bbox-MLP layer 2 (per-branch weights).
    h_s2 = jnp.maximum(
        jnp.dot(h_s, sw2_ref[0], preferred_element_type=jnp.float32)
        + sb2_ref[0],
        0.0,
    ).astype(x.dtype)
    h_o2 = jnp.maximum(
        jnp.dot(h_o, ow2_ref[0], preferred_element_type=jnp.float32)
        + ob2_ref[0],
        0.0,
    ).astype(x.dtype)

    # Fused bbox-MLP layer 3 on a row-stacked hidden state: [h_s2; h_o2] @ [sw3|ow3].
    h3 = jnp.concatenate([h_s2, h_o2], axis=0)        # (2*BQ, D) bf16
    box = (
        jnp.dot(h3, w3_ref[0], preferred_element_type=jnp.float32)
        + b3_ref[0]
    )                                                 # (2*BQ, 8) f32
    sub_box = jax.nn.sigmoid(box[:bq, 0:4])           # (BQ, 4)
    obj_box = jax.nn.sigmoid(box[bq:, 4:8])           # (BQ, 4)

    # Single full-width lane-dense store (last dim multiple of 128).
    out_ref[0] = jnp.concatenate([cls, sub_box, obj_box], axis=-1)


def run_heads(hs, params):
    """hs: (L, B, Q, D).  Head parameters carry a leading L dim (one set per
    decoder layer, mirroring _get_clones); the index_maps select layer l."""
    L, B, Q, D = hs.shape
    BQ = B * Q
    BQp = _round_up(BQ, 8)                 # sublane alignment

    hs_flat = hs.reshape(L, BQ, D)
    if BQp != BQ:
        hs_flat = jnp.pad(hs_flat, ((0, 0), (0, BQp - BQ), (0, 0)))
    hs_flat = hs_flat.astype(jnp.bfloat16)

    C_obj = params["obj_cls_w"].shape[-1]
    C_verb = params["verb_cls_w"].shape[-1]
    C_cls = C_obj + C_verb
    C_out = _round_up(C_cls + 8, 128)      # fused lane-dense output width
    C_cls_pad = C_out - 8

    # Fused, zero-column-padded class-head weight/bias, per layer.
    wcls = jnp.zeros((L, D, C_cls_pad), jnp.float32)
    wcls = wcls.at[:, :, :C_obj].set(params["obj_cls_w"])
    wcls = wcls.at[:, :, C_obj:C_cls].set(params["verb_cls_w"])
    bcls = jnp.zeros((L, 1, C_cls_pad), jnp.float32)
    bcls = bcls.at[:, 0, :C_obj].set(params["obj_cls_b"])
    bcls = bcls.at[:, 0, C_obj:C_cls].set(params["verb_cls_b"])

    # Fused bbox-MLP layer-1 and layer-3 weights, per layer.
    w1 = jnp.concatenate([params["sub_w1"], params["obj_w1"]], axis=2)   # (L, D, 2D)
    b1 = jnp.concatenate([params["sub_b1"], params["obj_b1"]], axis=1).reshape(L, 1, 2 * D)
    w3 = jnp.concatenate([params["sub_w3"], params["obj_w3"]], axis=2)   # (L, D, 8)
    b3 = jnp.concatenate([params["sub_b3"], params["obj_b3"]], axis=1).reshape(L, 1, 8)

    bf = lambda a: a.astype(jnp.bfloat16)
    row = lambda a: a.reshape(L, 1, -1).astype(jnp.float32)

    def layer_spec(tail):
        return pl.BlockSpec((1,) + tail, lambda l: (l, 0, 0))

    fused = pl.pallas_call(
        _heads_kernel,
        out_shape=jax.ShapeDtypeStruct((L, BQp, C_out), jnp.float32),
        grid_spec=pltpu.PrefetchScalarGridSpec(
            num_scalar_prefetch=0,
            grid=(L,),
            in_specs=[
                layer_spec((BQp, D)),                              # hs (per layer)
                layer_spec((D, C_cls_pad)), layer_spec((1, C_cls_pad)),  # class heads
                layer_spec((D, 2 * D)), layer_spec((1, 2 * D)),    # fused bbox layer 1
                layer_spec((D, D)), layer_spec((1, D)),            # sub layer 2
                layer_spec((D, D)), layer_spec((1, D)),            # obj layer 2
                layer_spec((D, 8)), layer_spec((1, 8)),            # fused bbox layer 3
            ],
            out_specs=layer_spec((BQp, C_out)),
        ),
        compiler_params=pltpu.CompilerParams(
            dimension_semantics=("parallel",),
            vmem_limit_bytes=32 * 1024 * 1024,
        ),
    )(
        hs_flat,
        bf(wcls), bcls.astype(jnp.float32),
        bf(w1), b1.astype(jnp.float32),
        bf(params["sub_w2"]), row(params["sub_b2"]),
        bf(params["obj_w2"]), row(params["obj_b2"]),
        bf(w3), b3.astype(jnp.float32),
    )

    fused = fused[:, :BQ, :].reshape(L, B, Q, C_out)
    obj_cls = fused[..., :C_obj]
    verb_cls = fused[..., C_obj:C_cls]
    sub_box = fused[..., C_cls_pad:C_cls_pad + 4]
    obj_box = fused[..., C_cls_pad + 4:C_cls_pad + 8]
    return obj_cls, verb_cls, sub_box, obj_box


# ----------------------------------------------------------------------------
# Deterministic stubs for backbone / transformer (external deps of DETRHOI)
# ----------------------------------------------------------------------------
def backbone_stub(samples):
    """Returns features[-1] = (src, mask) and pos[-1]."""
    B, C, H, W = samples.shape
    src = samples
    mask = jnp.zeros((B, H, W), dtype=jnp.bool_)
    pos = jnp.zeros((B, 1, H, W), dtype=jnp.float32)
    return src, mask, pos


def transformer_stub(proj_src, mask, query_embed, pos, num_decoder_layers):
    """Returns hs (L,B,Q,D), interactiveness (L,B,Q,1), ht (B,1,H,W), None."""
    B, D, H, W = proj_src.shape
    L = num_decoder_layers
    mem = jnp.mean(proj_src, axis=(2, 3))                        # (B, D)
    lvls = (jnp.arange(L, dtype=jnp.float32) + 1.0) * 0.1        # (L,)
    hs = jnp.tanh(
        query_embed[None, None, :, :]
        + mem[None, :, None, :] * lvls[:, None, None, None]
    )                                                            # (L, B, Q, D)
    interactiveness = jax.nn.sigmoid(jnp.mean(hs, axis=-1, keepdims=True))
    ht = jax.nn.sigmoid(jnp.mean(proj_src, axis=1, keepdims=True))  # (B, 1, H, W)
    return hs, interactiveness, ht, None


# ----------------------------------------------------------------------------
# DETRHOI parameter construction (deterministic) and forward
# ----------------------------------------------------------------------------
def make_params(key, *, in_channels, hidden_dim, num_queries,
                num_obj_classes, num_verb_classes, num_decoder_layers):
    L = num_decoder_layers
    keys = jax.random.split(key, 16)
    scale = 0.02
    D = hidden_dim

    def init(k, shape):
        return (scale * jax.random.normal(k, shape)).astype(jnp.float32)

    def clone(a):
        # _get_clones deep-copies the head -> L identical parameter sets.
        return jnp.broadcast_to(a[None], (L,) + a.shape).astype(jnp.float32)

    params = {
        "query_embed": init(keys[0], (num_queries, D)),
        "proj_w": init(keys[1], (D, in_channels)),    # (out, in) like Conv2d
        "proj_b": init(keys[2], (D,)),
        "obj_cls_w": clone(init(keys[3], (D, num_obj_classes + 1))),
        "obj_cls_b": clone(init(keys[4], (num_obj_classes + 1,))),
        "verb_cls_w": clone(init(keys[5], (D, num_verb_classes))),
        "verb_cls_b": clone(init(keys[6], (num_verb_classes,))),
        "sub_w1": clone(init(keys[7], (D, D))),
        "sub_b1": clone(init(keys[8], (D,))),
        "sub_w2": clone(init(keys[9], (D, D))),
        "sub_b2": clone(init(keys[10], (D,))),
        # last bbox layer is zero-initialized in the PyTorch module
        "sub_w3": jnp.zeros((L, D, 4), jnp.float32),
        "sub_b3": jnp.zeros((L, 4), jnp.float32),
        "obj_w1": clone(init(keys[11], (D, D))),
        "obj_b1": clone(init(keys[12], (D,))),
        "obj_w2": clone(init(keys[13], (D, D))),
        "obj_b2": clone(init(keys[14], (D,))),
        "obj_w3": jnp.zeros((L, D, 4), jnp.float32),
        "obj_b3": jnp.zeros((L, 4), jnp.float32),
    }
    return params


@functools.partial(jax.jit, static_argnames=("num_decoder_layers", "aux_loss"))
def detrhoi_forward(samples, params, *, num_decoder_layers=6, aux_loss=False):
    # backbone (stub)
    src, mask, pos = backbone_stub(samples)

    # input_proj: 1x1 conv in Pallas, output stays NCHW (no transposes)
    proj_src = input_proj_conv1x1(src, params["proj_w"], params["proj_b"])

    # transformer (stub)
    hs, interactiveness, ht, _ = transformer_stub(
        proj_src, mask, params["query_embed"], pos, num_decoder_layers
    )

    # prediction heads for all decoder layers in one fused Pallas kernel
    obj_cls, verb_cls, sub_box, obj_box = run_heads(hs, params)

    out = {
        "ratio": mask,
        "src_heatmap": ht,
        "pred_interactiveness": interactiveness[-1],
        "pred_obj_logits": obj_cls[-1],
        "pred_verb_logits": verb_cls[-1],
        "pred_sub_boxes": sub_box[-1],
        "pred_obj_boxes": obj_box[-1],
    }
    if aux_loss:
        out["aux_outputs"] = [
            {
                "pred_interactiveness": interactiveness[l],
                "pred_obj_logits": obj_cls[l],
                "pred_verb_logits": verb_cls[l],
                "pred_sub_boxes": sub_box[l],
                "pred_obj_boxes": obj_box[l],
            }
            for l in range(num_decoder_layers - 1)
        ]
    return out


# ----------------------------------------------------------------------------
# Pure-JAX reference (f32) for numerical validation of the Pallas path
# ----------------------------------------------------------------------------
def detrhoi_reference_last_layer(samples, params, *, num_decoder_layers=6):
    src, mask, pos = backbone_stub(samples)
    proj = (
        jnp.einsum("dc,bchw->bdhw", params["proj_w"], src)
        + params["proj_b"][None, :, None, None]
    )
    hs, _, _, _ = transformer_stub(
        proj, mask, params["query_embed"], pos, num_decoder_layers
    )
    lvl = num_decoder_layers - 1
    x = hs[-1]
    obj = x @ params["obj_cls_w"][lvl] + params["obj_cls_b"][lvl]
    verb = x @ params["verb_cls_w"][lvl] + params["verb_cls_b"][lvl]
    hsb = jax.nn.relu(x @ params["sub_w1"][lvl] + params["sub_b1"][lvl])
    hsb = jax.nn.relu(hsb @ params["sub_w2"][lvl] + params["sub_b2"][lvl])
    sub = jax.nn.sigmoid(hsb @ params["sub_w3"][lvl] + params["sub_b3"][lvl])
    hob = jax.nn.relu(x @ params["obj_w1"][lvl] + params["obj_b1"][lvl])
    hob = jax.nn.relu(hob @ params["obj_w2"][lvl] + params["obj_b2"][lvl])
    obox = jax.nn.sigmoid(hob @ params["obj_w3"][lvl] + params["obj_b3"][lvl])
    return proj, obj, verb, sub, obox


if __name__ == "__main__":
    B, C_in, H, W = 2, 4, 16, 16
    hidden_dim = 32
    num_queries = 8
    num_obj_classes = 5
    num_verb_classes = 7
    num_decoder_layers = 6

    key = jax.random.PRNGKey(0)
    k_params, k_x = jax.random.split(key)

    params = make_params(
        k_params,
        in_channels=C_in,
        hidden_dim=hidden_dim,
        num_queries=num_queries,
        num_obj_classes=num_obj_classes,
        num_verb_classes=num_verb_classes,
        num_decoder_layers=num_decoder_layers,
    )

    x = jax.random.normal(k_x, (B, C_in, H, W), dtype=jnp.float32)

    out = detrhoi_forward(
        x, params, num_decoder_layers=num_decoder_layers, aux_loss=False
    )
    jax.block_until_ready(out)

    # shape sanity checks
    assert out["pred_obj_logits"].shape == (B, num_queries, num_obj_classes + 1)
    assert out["pred_verb_logits"].shape == (B, num_queries, num_verb_classes)
    assert out["pred_sub_boxes"].shape == (B, num_queries, 4)
    assert out["pred_obj_boxes"].shape == (B, num_queries, 4)
    assert out["pred_interactiveness"].shape == (B, num_queries, 1)
    assert out["src_heatmap"].shape == (B, 1, H, W)
    assert out["ratio"].shape == (B, H, W)
    # zero-init last bbox layers -> sigmoid(0) = 0.5 exactly
    assert bool(jnp.all(out["pred_sub_boxes"] == 0.5))
    assert bool(jnp.all(out["pred_obj_boxes"] == 0.5))

    # numerical checks against a pure-JAX f32 reference (bf16 MXU tolerance)
    proj_ref, obj_ref, verb_ref, sub_ref, obox_ref = detrhoi_reference_last_layer(
        x, params, num_decoder_layers=num_decoder_layers
    )
    proj_pallas = input_proj_conv1x1(x, params["proj_w"], params["proj_b"])
    assert bool(jnp.allclose(proj_pallas, proj_ref, atol=2e-2, rtol=2e-2))
    assert bool(jnp.allclose(out["pred_obj_logits"], obj_ref, atol=2e-2, rtol=2e-2))
    assert bool(jnp.allclose(out["pred_verb_logits"], verb_ref, atol=2e-2, rtol=2e-2))
    assert bool(jnp.allclose(out["pred_sub_boxes"], sub_ref, atol=2e-2, rtol=2e-2))
    assert bool(jnp.allclose(out["pred_obj_boxes"], obox_ref, atol=2e-2, rtol=2e-2))

    print("KERNEL_OK")
</pallas_src>

<mosaic_0001>
module attributes {stable_mosaic.version = 11 : i64} {
  func.func @_conv1x1_kernel(%arg0: i32, %arg1: i32, %arg2: memref<1x4x256xbf16, #tpu.memory_space<vmem>>, %arg3: memref<32x4xbf16, #tpu.memory_space<vmem>>, %arg4: memref<32x1xf32, #tpu.memory_space<vmem>>, %arg5: memref<1x32x256xf32, #tpu.memory_space<vmem>>) attributes {dimension_semantics = [#tpu.dimension_semantics<parallel>, #tpu.dimension_semantics<parallel>], iteration_bounds = array<i64: 2, 1>, scalar_prefetch = 0 : i64, scratch_operands = 0 : i64, tpu.core_type = #tpu.core_type<tc>, window_params = [{transform_indices = @transform_0, window_bounds = array<i64: 1, 4, 256>}, {pipeline_mode = #tpu.pipeline_mode<synchronous>, transform_indices = @transform_1, window_bounds = array<i64: 32, 4>}, {pipeline_mode = #tpu.pipeline_mode<synchronous>, transform_indices = @transform_2, window_bounds = array<i64: 32, 1>}, {transform_indices = @transform_3, window_bounds = array<i64: 1, 32, 256>}]} {
    %c0 = arith.constant 0 : index
    %c0_0 = arith.constant 0 : index
    %0 = vector.load %arg3[%c0, %c0_0] : memref<32x4xbf16, #tpu.memory_space<vmem>>, vector<32x4xbf16>
    %c0_1 = arith.constant 0 : index
    %c0_2 = arith.constant 0 : index
    %c0_3 = arith.constant 0 : index
    %1 = vector.load %arg2[%c0_1, %c0_2, %c0_3] : memref<1x4x256xbf16, #tpu.memory_space<vmem>>, vector<1x4x256xbf16>
    %2 = vector.shape_cast %1 : vector<1x4x256xbf16> to vector<4x256xbf16>
    %cst = arith.constant dense<0.000000e+00> : vector<32x256xf32>
    %3 = tpu.matmul %0, %2, %cst {dimension_numbers = #tpu.dot_dimension_numbers<[1], [0], [0], [1], [0, 0, 1, 1], [], []>} : vector<32x4xbf16>, vector<4x256xbf16>, vector<32x256xf32> -> vector<32x256xf32>
    %c0_4 = arith.constant 0 : index
    %c0_5 = arith.constant 0 : index
    %4 = vector.load %arg4[%c0_4, %c0_5] : memref<32x1xf32, #tpu.memory_space<vmem>>, vector<32x1xf32>
    %5 = vector.broadcast %4 : vector<32x1xf32> to vector<32x256xf32>
    %6 = arith.addf %3, %5 : vector<32x256xf32>
    %c0_6 = arith.constant 0 : index
    %c0_7 = arith.constant 0 : index
    %c0_8 = arith.constant 0 : index
    %7 = vector.load %arg5[%c0_6, %c0_7, %c0_8] : memref<1x32x256xf32, #tpu.memory_space<vmem>>, vector<1x32x256xf32>
    %8 = vector.shape_cast %7 : vector<1x32x256xf32> to vector<32x256xf32>
    %9 = vector.shape_cast %6 : vector<32x256xf32> to vector<1x32x256xf32>
    tpu.vector_store %arg5[%c0_6, %c0_7, %c0_8], %9 {strides = array<i32>} : memref<1x32x256xf32, #tpu.memory_space<vmem>>, vector<1x32x256xf32>,
    return
  }
  func.func @transform_0(%arg0: i32, %arg1: i32) -> (i32, i32, i32) {
    %c0_i32 = arith.constant 0 : i32
    %c0_i32_0 = arith.constant 0 : i32
    return %arg0, %c0_i32, %arg1 : i32, i32, i32
  }
  func.func @transform_1(%arg0: i32, %arg1: i32) -> (i32, i32) {
    %c0_i32 = arith.constant 0 : i32
    %c0_i32_0 = arith.constant 0 : i32
    %c0_i32_1 = arith.constant 0 : i32
    return %c0_i32, %c0_i32_0 : i32, i32
  }
  func.func @transform_2(%arg0: i32, %arg1: i32) -> (i32, i32) {
    %c0_i32 = arith.constant 0 : i32
    %c0_i32_0 = arith.constant 0 : i32
    %c0_i32_1 = arith.constant 0 : i32
    return %c0_i32, %c0_i32_0 : i32, i32
  }
  func.func @transform_3(%arg0: i32, %arg1: i32) -> (i32, i32, i32) {
    %c0_i32 = arith.constant 0 : i32
    %c0_i32_0 = arith.constant 0 : i32
    return %arg0, %c0_i32, %arg1 : i32, i32, i32
  }
}

module attributes {stable_mosaic.version = 11 : i64} {
  func.func @_heads_kernel(%arg0: i32, %arg1: memref<1x16x32xbf16, #tpu.memory_space<vmem>>, %arg2: memref<1x32x120xbf16, #tpu.memory_space<vmem>>, %arg3: memref<1x1x120xf32, #tpu.memory_space<vmem>>, %arg4: memref<1x32x64xbf16, #tpu.memory_space<vmem>>, %arg5: memref<1x1x64xf32, #tpu.memory_space<vmem>>, %arg6: memref<1x32x32xbf16, #tpu.memory_space<vmem>>, %arg7: memref<1x1x32xf32, #tpu.memory_space<vmem>>, %arg8: memref<1x32x32xbf16, #tpu.memory_space<vmem>>, %arg9: memref<1x1x32xf32, #tpu.memory_space<vmem>>, %arg10: memref<1x32x8xbf16, #tpu.memory_space<vmem>>, %arg11: memref<1x1x8xf32, #tpu.memory_space<vmem>>, %arg12: memref<1x16x128xf32, #tpu.memory_space<vmem>>) attributes {dimension_semantics = [#tpu.dimension_semantics<parallel>], iteration_bounds = array<i64: 6>, scalar_prefetch = 0 : i64, scratch_operands = 0 : i64, tpu.core_type = #tpu.core_type<tc>, window_params = [{transform_indices = @transform_0, window_bounds = array<i64: 1, 16, 32>}, {transform_indices = @transform_1, window_bounds = array<i64: 1, 32, 120>}, {transform_indices = @transform_2, window_bounds = array<i64: 1, 1, 120>}, {transform_indices = @transform_3, window_bounds = array<i64: 1, 32, 64>}, {transform_indices = @transform_4, window_bounds = array<i64: 1, 1, 64>}, {transform_indices = @transform_5, window_bounds = array<i64: 1, 32, 32>}, {transform_indices = @transform_6, window_bounds = array<i64: 1, 1, 32>}, {transform_indices = @transform_7, window_bounds = array<i64: 1, 32, 32>}, {transform_indices = @transform_8, window_bounds = array<i64: 1, 1, 32>}, {transform_indices = @transform_9, window_bounds = array<i64: 1, 32, 8>}, {transform_indices = @transform_10, window_bounds = array<i64: 1, 1, 8>}, {transform_indices = @transform_11, window_bounds = array<i64: 1, 16, 128>}]} {
    %c0 = arith.constant 0 : index
    %c0_0 = arith.constant 0 : index
    %c0_1 = arith.constant 0 : index
    %0 = vector.load %arg1[%c0, %c0_0, %c0_1] : memref<1x16x32xbf16, #tpu.memory_space<vmem>>, vector<1x16x32xbf16>
    %1 = vector.shape_cast %0 : vector<1x16x32xbf16> to vector<16x32xbf16>
    %c0_2 = arith.constant 0 : index
    %c0_3 = arith.constant 0 : index
    %c0_4 = arith.constant 0 : index
    %2 = vector.load %arg2[%c0_2, %c0_3, %c0_4] : memref<1x32x120xbf16, #tpu.memory_space<vmem>>, vector<1x32x120xbf16>
    %3 = vector.shape_cast %2 : vector<1x32x120xbf16> to vector<32x120xbf16>
    %cst = arith.constant dense<0.000000e+00> : vector<16x120xf32>
    %4 = tpu.matmul %1, %3, %cst {dimension_numbers = #tpu.dot_dimension_numbers<[1], [0], [0], [1], [0, 0, 1, 1], [], []>} : vector<16x32xbf16>, vector<32x120xbf16>, vector<16x120xf32> -> vector<16x120xf32>
    %c0_5 = arith.constant 0 : index
    %c0_6 = arith.constant 0 : index
    %c0_7 = arith.constant 0 : index
    %5 = vector.load %arg3[%c0_5, %c0_6, %c0_7] : memref<1x1x120xf32, #tpu.memory_space<vmem>>, vector<1x1x120xf32>
    %6 = vector.shape_cast %5 : vector<1x1x120xf32> to vector<1x120xf32>
    %7 = vector.broadcast %6 : vector<1x120xf32> to vector<16x120xf32>
    %8 = arith.addf %4, %7 : vector<16x120xf32>
    %c0_8 = arith.constant 0 : index
    %c0_9 = arith.constant 0 : index
    %c0_10 = arith.constant 0 : index
    %9 = vector.load %arg4[%c0_8, %c0_9, %c0_10] : memref<1x32x64xbf16, #tpu.memory_space<vmem>>, vector<1x32x64xbf16>
    %10 = vector.shape_cast %9 : vector<1x32x64xbf16> to vector<32x64xbf16>
    %cst_11 = arith.constant dense<0.000000e+00> : vector<16x64xf32>
    %11 = tpu.matmul %1, %10, %cst_11 {dimension_numbers = #tpu.dot_dimension_numbers<[1], [0], [0], [1], [0, 0, 1, 1], [], []>} : vector<16x32xbf16>, vector<32x64xbf16>, vector<16x64xf32> -> vector<16x64xf32>
    %c0_12 = arith.constant 0 : index
    %c0_13 = arith.constant 0 : index
    %c0_14 = arith.constant 0 : index
    %12 = vector.load %arg5[%c0_12, %c0_13, %c0_14] : memref<1x1x64xf32, #tpu.memory_space<vmem>>, vector<1x1x64xf32>
    %13 = vector.shape_cast %12 : vector<1x1x64xf32> to vector<1x64xf32>
    %14 = vector.broadcast %13 : vector<1x64xf32> to vector<16x64xf32>
    %15 = arith.addf %11, %14 : vector<16x64xf32>
    %cst_15 = arith.constant 0.000000e+00 : f32
    %16 = vector.broadcast %cst_15 : f32 to vector<16x64xf32>
    %17 = arith.maximumf %15, %16 : vector<16x64xf32>
    %18 = arith.truncf %17 : vector<16x64xf32> to vector<16x64xbf16>
    %19 = vector.extract_strided_slice %18 {offsets = [0, 0], sizes = [16, 32], strides = [1, 1]} : vector<16x64xbf16> to vector<16x32xbf16>
    %20 = vector.extract_strided_slice %18 {offsets = [0, 32], sizes = [16, 32], strides = [1, 1]} : vector<16x64xbf16> to vector<16x32xbf16>
    %c0_16 = arith.constant 0 : index
    %c0_17 = arith.constant 0 : index
    %c0_18 = arith.constant 0 : index
    %21 = vector.load %arg6[%c0_16, %c0_17, %c0_18] : memref<1x32x32xbf16, #tpu.memory_space<vmem>>, vector<1x32x32xbf16>
    %22 = vector.shape_cast %21 : vector<1x32x32xbf16> to vector<32x32xbf16>
    %cst_19 = arith.constant dense<0.000000e+00> : vector<16x32xf32>
    %23 = tpu.matmul %19, %22, %cst_19 {dimension_numbers = #tpu.dot_dimension_numbers<[1], [0], [0], [1], [0, 0, 1, 1], [], []>} : vector<16x32xbf16>, vector<32x32xbf16>, vector<16x32xf32> -> vector<16x32xf32>
    %c0_20 = arith.constant 0 : index
    %c0_21 = arith.constant 0 : index
    %c0_22 = arith.constant 0 : index
    %24 = vector.load %arg7[%c0_20, %c0_21, %c0_22] : memref<1x1x32xf32, #tpu.memory_space<vmem>>, vector<1x1x32xf32>
    %25 = vector.shape_cast %24 : vector<1x1x32xf32> to vector<1x32xf32>
    %26 = vector.broadcast %25 : vector<1x32xf32> to vector<16x32xf32>
    %27 = arith.addf %23, %26 : vector<16x32xf32>
    %cst_23 = arith.constant 0.000000e+00 : f32
    %28 = vector.broadcast %cst_23 : f32 to vector<16x32xf32>
    %29 = arith.maximumf %27, %28 : vector<16x32xf32>
    %30 = arith.truncf %29 : vector<16x32xf32> to vector<16x32xbf16>
    %c0_24 = arith.constant 0 : index
    %c0_25 = arith.constant 0 : index
    %c0_26 = arith.constant 0 : index
    %31 = vector.load %arg8[%c0_24, %c0_25, %c0_26] : memref<1x32x32xbf16, #tpu.memory_space<vmem>>, vector<1x32x32xbf16>
    %32 = vector.shape_cast %31 : vector<1x32x32xbf16> to vector<32x32xbf16>
    %cst_27 = arith.constant dense<0.000000e+00> : vector<16x32xf32>
    %33 = tpu.matmul %20, %32, %cst_27 {dimension_numbers = #tpu.dot_dimension_numbers<[1], [0], [0], [1], [0, 0, 1, 1], [], []>} : vector<16x32xbf16>, vector<32x32xbf16>, vector<16x32xf32> -> vector<16x32xf32>
    %c0_28 = arith.constant 0 : index
    %c0_29 = arith.constant 0 : index
    %c0_30 = arith.constant 0 : index
    %34 = vector.load %arg9[%c0_28, %c0_29, %c0_30] : memref<1x1x32xf32, #tpu.memory_space<vmem>>, vector<1x1x32xf32>
    %35 = vector.shape_cast %34 : vector<1x1x32xf32> to vector<1x32xf32>
    %36 = vector.broadcast %35 : vector<1x32xf32> to vector<16x32xf32>
    %37 = arith.addf %33, %36 : vector<16x32xf32>
    %cst_31 = arith.constant 0.000000e+00 : f32
    %38 = vector.broadcast %cst_31 : f32 to vector<16x32xf32>
    %39 = arith.maximumf %37, %38 : vector<16x32xf32>
    %40 = arith.truncf %39 : vector<16x32xf32> to vector<16x32xbf16>
    %41 = tpu.concatenate %30, %40 in 0 : vector<16x32xbf16>, vector<16x32xbf16> -> vector<32x32xbf16>
    %c0_32 = arith.constant 0 : index
    %c0_33 = arith.constant 0 : index
    %c0_34 = arith.constant 0 : index
    %42 = vector.load %arg10[%c0_32, %c0_33, %c0_34] : memref<1x32x8xbf16, #tpu.memory_space<vmem>>, vector<1x32x8xbf16>
    %43 = vector.shape_cast %42 : vector<1x32x8xbf16> to vector<32x8xbf16>
    %cst_35 = arith.constant dense<0.000000e+00> : vector<32x8xf32>
    %44 = tpu.matmul %41, %43, %cst_35 {dimension_numbers = #tpu.dot_dimension_numbers<[1], [0], [0], [1], [0, 0, 1, 1], [], []>} : vector<32x32xbf16>, vector<32x8xbf16>, vector<32x8xf32> -> vector<32x8xf32>
    %c0_36 = arith.constant 0 : index
    %c0_37 = arith.constant 0 : index
    %c0_38 = arith.constant 0 : index
    %45 = vector.load %arg11[%c0_36, %c0_37, %c0_38] : memref<1x1x8xf32, #tpu.memory_space<vmem>>, vector<1x1x8xf32>
    %46 = vector.shape_cast %45 : vector<1x1x8xf32> to vector<1x8xf32>
    %47 = vector.broadcast %46 : vector<1x8xf32> to vector<32x8xf32>
    %48 = arith.addf %44, %47 : vector<32x8xf32>
    %49 = vector.extract_strided_slice %48 {offsets = [0, 0], sizes = [16, 4], strides = [1, 1]} : vector<32x8xf32> to vector<16x4xf32>
    %50 = arith.negf %49 : vector<16x4xf32>
    %51 = math.exp %50 : vector<16x4xf32>
    %cst_39 = arith.constant 1.000000e+00 : f32
    %52 = vector.broadcast %cst_39 : f32 to vector<16x4xf32>
    %53 = arith.addf %52, %51 : vector<16x4xf32>
    %54 = arith.divf %52, %53 : vector<16x4xf32>
    %55 = vector.extract_strided_slice %48 {offsets = [16, 4], sizes = [16, 4], strides = [1, 1]} : vector<32x8xf32> to vector<16x4xf32>
    %56 = arith.negf %55 : vector<16x4xf32>
    %57 = math.exp %56 : vector<16x4xf32>
    %cst_40 = arith.constant 1.000000e+00 : f32
    %58 = vector.broadcast %cst_40 : f32 to vector<16x4xf32>
    %59 = arith.addf %58, %57 : vector<16x4xf32>
    %60 = arith.divf %58, %59 : vector<16x4xf32>
    %61 = tpu.concatenate %8, %54, %60 in 1 : vector<16x120xf32>, vector<16x4xf32>, vector<16x4xf32> -> vector<16x128xf32>
    %c0_41 = arith.constant 0 : index
    %c0_42 = arith.constant 0 : index
    %c0_43 = arith.constant 0 : index
    %62 = vector.load %arg12[%c0_41, %c0_42, %c0_43] : memref<1x16x128xf32, #tpu.memory_space<vmem>>, vector<1x16x128xf32>
    %63 = vector.shape_cast %62 : vector<1x16x128xf32> to vector<16x128xf32>
    %64 = vector.shape_cast %61 : vector<16x128xf32> to vector<1x16x128xf32>
    tpu.vector_store %arg12[%c0_41, %c0_42, %c0_43], %64 {strides = array<i32>} : memref<1x16x128xf32, #tpu.memory_space<vmem>>, vector<1x16x128xf32>,
    return
  }
  func.func @transform_0(%arg0: i32) -> (i32, i32, i32) {
    %c0_i32 = arith.constant 0 : i32
    %c0_i32_0 = arith.constant 0 : i32
    %c0_i32_1 = arith.constant 0 : i32
    return %arg0, %c0_i32, %c0_i32_0 : i32, i32, i32
  }
  func.func @transform_1(%arg0: i32) -> (i32, i32, i32) {
    %c0_i32 = arith.constant 0 : i32
    %c0_i32_0 = arith.constant 0 : i32
    %c0_i32_1 = arith.constant 0 : i32
    return %arg0, %c0_i32, %c0_i32_0 : i32, i32, i32
  }
  func.func @transform_2(%arg0: i32) -> (i32, i32, i32) {
    %c0_i32 = arith.constant 0 : i32
    %c0_i32_0 = arith.constant 0 : i32
    %c0_i32_1 = arith.constant 0 : i32
    return %arg0, %c0_i32, %c0_i32_0 : i32, i32, i32
  }
  func.func @transform_3(%arg0: i32) -> (i32, i32, i32) {
    %c0_i32 = arith.constant 0 : i32
    %c0_i32_0 = arith.constant 0 : i32
    %c0_i32_1 = arith.constant 0 : i32
    return %arg0, %c0_i32, %c0_i32_0 : i32, i32, i32
  }
  func.func @transform_4(%arg0: i32) -> (i32, i32, i32) {
    %c0_i32 = arith.constant 0 : i32
    %c0_i32_0 = arith.constant 0 : i32
    %c0_i32_1 = arith.constant 0 : i32
    return %arg0, %c0_i32, %c0_i32_0 : i32, i32, i32
  }
  func.func @transform_5(%arg0: i32) -> (i32, i32, i32) {
    %c0_i32 = arith.constant 0 : i32
    %c0_i32_0 = arith.constant 0 : i32
    %c0_i32_1 = arith.constant 0 : i32
    return %arg0, %c0_i32, %c0_i32_0 : i32, i32, i32
  }
  func.func @transform_6(%arg0: i32) -> (i32, i32, i32) {
    %c0_i32 = arith.constant 0 : i32
    %c0_i32_0 = arith.constant 0 : i32
    %c0_i32_1 = arith.constant 0 : i32
    return %arg0, %c0_i32, %c0_i32_0 : i32, i32, i32
  }
  func.func @transform_7(%arg0: i32) -> (i32, i32, i32) {
    %c0_i32 = arith.constant 0 : i32
    %c0_i32_0 = arith.constant 0 : i32
    %c0_i32_1 = arith.constant 0 : i32
    return %arg0, %c0_i32, %c0_i32_0 : i32, i32, i32
  }
  func.func @transform_8(%arg0: i32) -> (i32, i32, i32) {
    %c0_i32 = arith.constant 0 : i32
    %c0_i32_0 = arith.constant 0 : i32
    %c0_i32_1 = arith.constant 0 : i32
    return %arg0, %c0_i32, %c0_i32_0 : i32, i32, i32
  }
  func.func @transform_9(%arg0: i32) -> (i32, i32, i32) {
    %c0_i32 = arith.constant 0 : i32
    %c0_i32_0 = arith.constant 0 : i32
    %c0_i32_1 = arith.constant 0 : i32
    return %arg0, %c0_i32, %c0_i32_0 : i32, i32, i32
  }
  func.func @transform_10(%arg0: i32) -> (i32, i32, i32) {
    %c0_i32 = arith.constant 0 : i32
    %c0_i32_0 = arith.constant 0 : i32
    %c0_i32_1 = arith.constant 0 : i32
    return %arg0, %c0_i32, %c0_i32_0 : i32, i32, i32
  }
  func.func @transform_11(%arg0: i32) -> (i32, i32, i32) {
    %c0_i32 = arith.constant 0 : i32
    %c0_i32_0 = arith.constant 0 : i32
    %c0_i32_1 = arith.constant 0 : i32
    return %arg0, %c0_i32, %c0_i32_0 : i32, i32, i32
  }
}

</mosaic_0001>

<llo_original>
// kernel: detrhoi_forward.2
$region0: #{detrhoi_forward.2}
  #allocation0 [shape = 'u32[]', space=smem, size = 0x4, offset = 0x4, fixed_abs, tag = 'smem constant byte address 0x4 - core index']
  #allocation1 [shape = 'u32[72,128]{1,0:T(1,128)}', space=vmem, size = 0x9000, scoped, tag = 'internal scratch']
  %s0 = inlined_call_operand.vmem [shape: bf16[2,4,256], index: 0, kind: input, shape index: {}]
  %s1 = inlined_call_operand.vmem [shape: bf16[32,4], index: 1, kind: input, shape index: {}]
  %s2 = inlined_call_operand.vmem [shape: f32[32,1], index: 2, kind: input, shape index: {}]
  %s3 = inlined_call_operand.vmem [shape: f32[2,32,256], index: 3, kind: output, shape index: {}]
  %s4 = sld [smem:[#allocation0]]
  $region45: #{detrhoi_forward.2} parent=0
    _
  %s6 = ssub.s32 1, %s4
  %s7 = scalar_select 0, %s6, %s4
  loop: start=0, step=1, limit=4
  $region2: #{detrhoi_forward.2} parent=0 // loop_pre_header
    _
  $region3: #{detrhoi_forward.2} parent=0 // loop_header
    %s9 = sphi 0, %s13
    %p10 = scmp.ge.s32.totalorder %s9, 4
    %s16 = sphi 0, %s28
    %s17 = sphi 0, %s24
    %s18 = sphi 0, %s16
    %s19 = sphi 0, %s17
    %s20 = sphi 0, %s18
    %s21 = sphi 0, %s19
    %s33 = sphi 0, %s35
    %s36 = sphi 0, %s33
    %s37 = sphi 0, %s36
    %s53 = sphi 0, %s37
    %s57 = sphi 0, %s57
    %s59 = sphi 0, %s57
    %s60 = sphi 0, %s59
    %s74 = sphi 0, %s60
    %s78 = sphi 0, %s78
    %s80 = sphi 0, %s78
    %s81 = sphi 0, %s80
    %s95 = sphi 0, %s81
    %s103 = sphi 0, %s105
    %s106 = sphi 0, %s103
    %s107 = sphi 0, %s106
    %s123 = sphi 0, %s107
  $region4: #{detrhoi_forward.2} parent=0 // loop_header_branch
    %12 = sbr.rel (%p10) target = $region8
  $region5: #{detrhoi_forward.2} parent=0 // loop_body
    %s14 = ssub.s32 %s9, 1
    %s15 = ssub.s32 %s9, 2
    %s22 = sadd.s32 1, %s17
    %p23 = scmp.ge.s32.totalorder %s22, 1
    %s24 = scalar_select %p23, 0, %s22
    %s25 = sadd.s32 1, %s16
    %s26 = scalar_select %p23, %s25, %s16
    %p27 = scmp.ge.s32.totalorder %s26, 2
    %s28 = scalar_select %p27, 0, %s26
    %s29 = ssub.s32 %s16, %s28
    %s30 = ssub.s32 %s17, %s24
    %s31 = sor.u32 %s29, %s30
    %p32 = scmp.eq.s32.totalorder %s31, 0
    %s34 = sadd.s32 %s33, 1
    %s35 = scalar_select %p32, %s33, %s34
    %p38 = pneg %p32
    %p39 = scmp.eq.s32.totalorder %s9, 1
    %p40 = por %p38, %p39
    %p41 = scmp.ne.s32.totalorder %s33, %s36
    %p42 = scmp.eq.s32.totalorder %s9, 0
    %p43 = por %p41, %p42
    %p44 = scmp.ne.s32.totalorder %s33, %s36
    %p45 = scmp.eq.s32.totalorder %s14, 1
    %p46 = por %p44, %p45
    %p47 = scmp.ne.s32.totalorder %s36, %s37
    %p48 = scmp.eq.s32.totalorder %s14, 0
    %p49 = por %p47, %p48
    %p50 = scmp.ne.s32.totalorder %s36, %s37
    %p51 = scmp.eq.s32.totalorder %s15, 1
    %p52 = por %p50, %p51
    %p54 = scmp.ne.s32.totalorder %s37, %s53
    %p55 = scmp.eq.s32.totalorder %s15, 0
    %p56 = por %p54, %p55
    %s58 = sadd.s32 %s57, 1
    %p61 = scmp.eq.s32.totalorder %s9, 1
    %p62 = scmp.ne.s32.totalorder %s57, %s59
    %p63 = scmp.eq.s32.totalorder %s9, 0
    %p64 = por %p62, %p63
    %p65 = scmp.ne.s32.totalorder %s57, %s59
    %p66 = scmp.eq.s32.totalorder %s14, 1
    %p67 = por %p65, %p66
    %p68 = scmp.ne.s32.totalorder %s59, %s60
    %p69 = scmp.eq.s32.totalorder %s14, 0
    %p70 = por %p68, %p69
    %p71 = scmp.ne.s32.totalorder %s59, %s60
    %p72 = scmp.eq.s32.totalorder %s15, 1
    %p73 = por %p71, %p72
    %p75 = scmp.ne.s32.totalorder %s60, %s74
    %p76 = scmp.eq.s32.totalorder %s15, 0
    %p77 = por %p75, %p76
    %s79 = sadd.s32 %s78, 1
    %p82 = scmp.eq.s32.totalorder %s9, 1
    %p83 = scmp.ne.s32.totalorder %s78, %s80
    %p84 = scmp.eq.s32.totalorder %s9, 0
    %p85 = por %p83, %p84
    %p86 = scmp.ne.s32.totalorder %s78, %s80
    %p87 = scmp.eq.s32.totalorder %s14, 1
    %p88 = por %p86, %p87
    %p89 = scmp.ne.s32.totalorder %s80, %s81
    %p90 = scmp.eq.s32.totalorder %s14, 0
    %p91 = por %p89, %p90
    %p92 = scmp.ne.s32.totalorder %s80, %s81
    %p93 = scmp.eq.s32.totalorder %s15, 1
    %p94 = por %p92, %p93
    %p96 = scmp.ne.s32.totalorder %s81, %s95
    %p97 = scmp.eq.s32.totalorder %s15, 0
    %p98 = por %p96, %p97
    %s99 = ssub.s32 %s16, %s28
    %s100 = ssub.s32 %s17, %s24
    %s101 = sor.u32 %s99, %s100
    %p102 = scmp.eq.s32.totalorder %s101, 0
    %s104 = sadd.s32 %s103, 1
    %s105 = scalar_select %p102, %s103, %s104
    %p108 = pneg %p102
    %p109 = scmp.eq.s32.totalorder %s9, 1
    %p110 = por %p108, %p109
    %p111 = scmp.ne.s32.totalorder %s103, %s106
    %p112 = scmp.eq.s32.totalorder %s9, 0
    %p113 = por %p111, %p112
    %p114 = scmp.ne.s32.totalorder %s103, %s106
    %p115 = scmp.eq.s32.totalorder %s14, 1
    %p116 = por %p114, %p115
    %p117 = scmp.ne.s32.totalorder %s106, %s107
    %p118 = scmp.eq.s32.totalorder %s14, 0
    %p119 = por %p117, %p118
    %p120 = scmp.ne.s32.totalorder %s106, %s107
    %p121 = scmp.eq.s32.totalorder %s15, 1
    %p122 = por %p120, %p121
    %p124 = scmp.ne.s32.totalorder %s107, %s123
    %p125 = scmp.eq.s32.totalorder %s15, 0
    %p126 = por %p124, %p125
    %p127 = scmp.le.s32.totalorder 1, %s9
    %p128 = scmp.lt.s32.totalorder %s9, 3
    %p129 = pnand %p127, %p128
    %p130 = pneg %p129
    // Predicated region
    $region9: #{detrhoi_forward.2} parent=5 // pred_check
      _
    $region10: #{detrhoi_forward.2} parent=5 // pred_check_branch
      %132 = sbr.rel (%p129) target = $region12
    $region11: #{detrhoi_forward.2} parent=5 // pred_region
      %s133 = ssub.s32 %s9, 1
      // Predicated region
      $region13: #{detrhoi_forward.2} parent=11 // pred_check
        %p134 = pneg %p70
      $region14: #{detrhoi_forward.2} parent=11 // pred_check_branch
        %136 = sbr.rel (%p134) target = $region16
      $region15: #{detrhoi_forward.2} parent=11 // pred_region
        _
      $region16: #{detrhoi_forward.2} parent=11 // pred_fallthru
        _
      // Predicated region
      $region17: #{detrhoi_forward.2} parent=11 // pred_check
        %p137 = pneg %p91
      $region18: #{detrhoi_forward.2} parent=11 // pred_check_branch
        %139 = sbr.rel (%p137) target = $region20
      $region19: #{detrhoi_forward.2} parent=11 // pred_region
        _
      $region20: #{detrhoi_forward.2} parent=11 // pred_fallthru
        _
    $region12: #{detrhoi_forward.2} parent=5 // pred_fallthru
      _
    %p140 = scmp.lt.s32.totalorder %s9, 2
    // Predicated region
    $region21: #{detrhoi_forward.2} parent=5 // pred_check
      %p141 = pneg %p140
    $region22: #{detrhoi_forward.2} parent=5 // pred_check_branch
      %143 = sbr.rel (%p141) target = $region24
    $region23: #{detrhoi_forward.2} parent=5 // pred_region
      // Predicated region
      $region25: #{detrhoi_forward.2} parent=23 // pred_check
        %p144 = pneg %p43
      $region26: #{detrhoi_forward.2} parent=23 // pred_check_branch
        %146 = sbr.rel (%p144) target = $region28
      $region27: #{detrhoi_forward.2} parent=23 // pred_region
        %s147 = smul.u32 2, %s17
        %p148 = scmp.lt.s32.totalorder %s16, 1
        %s149 = scalar_select %p148, %s16, 1
        %p150 = scmp.lt.s32.totalorder %s147, 1
        %s151 = scalar_select %p150, %s147, 1
        %s152 = smul.addr %s149, 2
        %s153 = sadd.s32 %s151, %s152
        %s154 = smul.addr %s153, 2
        %s155 = scalar_lea.vmem %s0, %s154
        %s156 = smul.u32 2, %s17
      $region28: #{detrhoi_forward.2} parent=23 // pred_fallthru
        _
    $region24: #{detrhoi_forward.2} parent=5 // pred_fallthru
      _
    %p157 = scmp.le.s32.totalorder 1, %s9
    %p158 = scmp.lt.s32.totalorder %s9, 3
    %p159 = pnand %p157, %p158
    %p160 = pneg %p159
    // Predicated region
    $region29: #{detrhoi_forward.2} parent=5 // pred_check
      _
    $region30: #{detrhoi_forward.2} parent=5 // pred_check_branch
      %162 = sbr.rel (%p159) target = $region32
    $region31: #{detrhoi_forward.2} parent=5 // pred_region
      %s163 = ssub.s32 %s9, 1
      %s164 = smul.u32 2, %s19
      %p165 = scmp.lt.s32.totalorder %s18, 1
      %s166 = scalar_select %p165, %s18, 1
      %p167 = scmp.lt.s32.totalorder %s164, 1
      %s168 = scalar_select %p167, %s164, 1
      %s169 = smul.addr %s166, 2
      %s170 = sadd.s32 %s168, %s169
      %s171 = smul.addr %s170, 2
      %s172 = scalar_lea.vmem %s0, %s171
      %p173 = pneg %p49
      %p174 = pneg %p46
      %p175 = pneg %p70
      %p176 = pneg %p67
      %p177 = pneg %p91
      %p178 = pneg %p88
      %p179 = pneg %p119
      %p180 = pneg %p116
      %s181 = smul.u32 2, %s19
      %p182 = scmp.lt.s32.totalorder %s18, 1
      %s183 = scalar_select %p182, %s18, 1
      %p184 = scmp.lt.s32.totalorder %s181, 1
      %s185 = scalar_select %p184, %s181, 1
      %s186 = smul.addr %s183, 8
      %s187 = sadd.s32 %s185, %s186
      %s188 = smul.addr %s187, 8
      %s189 = scalar_lea.vmem %s3, %s188
      %s190 = smul.u32 2, %s19
      %p191 = scmp.lt.s32.totalorder %s18, 1
      %s192 = scalar_select %p191, %s18, 1
      %p193 = scmp.lt.s32.totalorder %s190, 1
      %s194 = scalar_select %p193, %s190, 1
      %s195 = smul.addr %s192, 2
      %s196 = sadd.s32 %s194, %s195
      %s197 = smul.addr %s196, 2
      %s198 = scalar_lea.vmem %s0, %s197
      %s199 = smul.u32 2, %s19
      %s200 = smul.u32 2, %s19
      %p201 = scmp.lt.s32.totalorder %s18, 1
      %s202 = scalar_select %p201, %s18, 1
      %p203 = scmp.lt.s32.totalorder %s200, 1
      %s204 = scalar_select %p203, %s200, 1
      %s205 = smul.addr %s202, 8
      %s206 = sadd.s32 %s204, %s205
      %s207 = smul.addr %s206, 8
      %s208 = scalar_lea.vmem %s3, %s207
      %s209 = smul.u32 2, %s19
      %v211 = vld [vmem:[%s1] sm:$0xf]
      %v212 = vld [vmem:[%s1 + $0x4] sm:$0xf]
      %v213 = vld [vmem:[%s1 + $0x8] sm:$0xf]
      %v214 = vld [vmem:[%s1 + $0xc] sm:$0xf]
      %v215 = vld [vmem:[%s198] sm:$0xf]
      %v216 = vld [vmem:[%s2] sm:$0xff]
      %v217 = vld [vmem:[%s2 + $0x8] sm:$0xff]
      %v218 = vld [vmem:[%s2 + $0x10] sm:$0xff]
      %v219 = vld [vmem:[%s2 + $0x18] sm:$0xff]
      %221 = vset.pattern.permute.xlu0 0
      %222 = vperm.xlu0 %221, %v216
      %v223 = vpop.permute.xlu0 %222
      %226 = vset.pattern.permute.xlu0 0
      %227 = vperm.xlu0 %226, %v217
      %v228 = vpop.permute.xlu0 %227
      %231 = vset.pattern.permute.xlu0 0
      %232 = vperm.xlu0 %231, %v218
      %v233 = vpop.permute.xlu0 %232
      %236 = vset.pattern.permute.xlu0 0
      %237 = vperm.xlu0 %236, %v219
      %v238 = vpop.permute.xlu0 %237
      %v244 = vunpack.c.l.b16 %v211
      %v245 = vunpack.c.l.b16 %v212
      %v246 = vunpack.c.l.b16 %v213
      %v247 = vunpack.c.l.b16 %v214
      %v248 = vpack.c.b16 %v245, %v244
      %v249 = vpack.c.b16 %v247, %v246
      %251 = vst [vmem:[#allocation1] ss:$4 sm:$0xff] %v215
      %v252 = vld.sshfl [vmem:[#allocation1] sm:$0xff pattern:$0x73625140]
      %v253 = vld.sshfl [vmem:[#allocation1 + $0x8] sm:$0xff pattern:$0x73625140]
      %vm254 = vcmask 31744
      %v256 = vsel %vm254, %v248, 0
      %v259 = vsel %vm254, %v249, 0
      %vm261 = vcmask 1041408
      %v262 = vsel %vm261, %v252, 0
      %v264 = vsel %vm261, %v253, 0
      %266 = vmatpush.bf16.msra.mxu0 0
      %267 = vmatpush.bf16.msra.mxu0 0
      %268 = vmatpush.bf16.msra.mxu0 0
      %269 = vmatpush.bf16.msra.mxu0 0
      %270 = vmatpush.bf16.msra.mxu0 0
      %271 = vmatpush.bf16.msra.mxu0 0
      %272 = vmatpush.bf16.msra.mxu0 0
      %273 = vmatpush.bf16.msra.mxu0 %v262
      %274 = vmatmul.bf16.gmra.mxu0 %v256
      %v275 = vpop.f32.mrf.mxu0
      %v276 = vadd.f32 %v223, %v275
      %v277 = vpop.f32.mrf.mxu0
      %v278 = vadd.f32 %v228, %v277
      %279 = vmatmul.bf16.gmra.mxu0 %v259
      %v280 = vpop.f32.mrf.mxu0
      %v281 = vadd.f32 %v233, %v280
      %v282 = vpop.f32.mrf.mxu0
      %v283 = vadd.f32 %v238, %v282
      %284 = vdwg.mxu0
      %285 = vmatpush.bf16.msra.mxu0 0
      %286 = vmatpush.bf16.msra.mxu0 0
      %287 = vmatpush.bf16.msra.mxu0 0
      %288 = vmatpush.bf16.msra.mxu0 0
      %289 = vmatpush.bf16.msra.mxu0 0
      %290 = vmatpush.bf16.msra.mxu0 0
      %291 = vmatpush.bf16.msra.mxu0 0
      %292 = vmatpush.bf16.msra.mxu0 %v264
      %293 = vmatmul.bf16.gmra.mxu0 %v256
      %v294 = vpop.f32.mrf.mxu0
      %v295 = vadd.f32 %v223, %v294
      %v296 = vpop.f32.mrf.mxu0
      %v297 = vadd.f32 %v228, %v296
      %298 = vmatmul.bf16.gmra.mxu0 %v259
      %v299 = vpop.f32.mrf.mxu0
      %v300 = vadd.f32 %v233, %v299
      %v301 = vpop.f32.mrf.mxu0
      %v302 = vadd.f32 %v238, %v301
      %303 = vdwg.mxu0
      %304 = vst [vmem:[%s208] sm:$0xff] %v276
      %305 = vst [vmem:[%s208 + $0x8] sm:$0xff] %v295
      %306 = vst [vmem:[%s208 + $0x10] sm:$0xff] %v278
      %307 = vst [vmem:[%s208 + $0x18] sm:$0xff] %v297
      %308 = vst [vmem:[%s208 + $0x20] sm:$0xff] %v281
      %309 = vst [vmem:[%s208 + $0x28] sm:$0xff] %v300
      %310 = vst [vmem:[%s208 + $0x30] sm:$0xff] %v283
      %311 = vst [vmem:[%s208 + $0x38] sm:$0xff] %v302
      %s312 = smul.u32 2, %s19
      %p313 = scmp.lt.s32.totalorder %s18, 1
      %s314 = scalar_select %p313, %s18, 1
      %p315 = scmp.lt.s32.totalorder %s312, 1
      %s316 = scalar_select %p315, %s312, 1
      %s317 = smul.addr %s314, 8
      %s318 = sadd.s32 %s316, %s317
      %s319 = smul.addr %s318, 8
      %s320 = scalar_lea.vmem %s3, %s319
      // Predicated region
      $region33: #{detrhoi_forward.2} parent=31 // pred_check
        %p321 = pneg %p116
      $region34: #{detrhoi_forward.2} parent=31 // pred_check_branch
        %323 = sbr.rel (%p321) target = $region36
      $region35: #{detrhoi_forward.2} parent=31 // pred_region
        %s324 = smul.u32 2, %s19
      $region36: #{detrhoi_forward.2} parent=31 // pred_fallthru
        _
    $region32: #{detrhoi_forward.2} parent=5 // pred_fallthru
      _
    %p325 = scmp.le.s32.totalorder 2, %s9
    // Predicated region
    $region37: #{detrhoi_forward.2} parent=5 // pred_check
      %p326 = pneg %p325
    $region38: #{detrhoi_forward.2} parent=5 // pred_check_branch
      %328 = sbr.rel (%p326) target = $region40
    $region39: #{detrhoi_forward.2} parent=5 // pred_region
      %s329 = ssub.s32 %s9, 2
      // Predicated region
      $region41: #{detrhoi_forward.2} parent=39 // pred_check
        %p330 = pneg %p122
      $region42: #{detrhoi_forward.2} parent=39 // pred_check_branch
        %332 = sbr.rel (%p330) target = $region44
      $region43: #{detrhoi_forward.2} parent=39 // pred_region
        %s333 = smul.u32 2, %s21
        %p334 = scmp.lt.s32.totalorder %s20, 1
        %s335 = scalar_select %p334, %s20, 1
        %p336 = scmp.lt.s32.totalorder %s333, 1
        %s337 = scalar_select %p336, %s333, 1
        %s338 = smul.addr %s335, 8
        %s339 = sadd.s32 %s337, %s338
        %s340 = smul.addr %s339, 8
        %s341 = scalar_lea.vmem %s3, %s340
      $region44: #{detrhoi_forward.2} parent=39 // pred_fallthru
        _
    $region40: #{detrhoi_forward.2} parent=5 // pred_fallthru
      _
  $region6: #{detrhoi_forward.2} parent=0 // loop_footer
    %s13 = sadd.s32 1, %s9
  $region7: #{detrhoi_forward.2} parent=0 // loop_footer_branch
    %8 = sbr.rel target = $region3
  $region8: #{detrhoi_forward.2} parent=0 // loop_exit
    _

// kernel: detrhoi_forward.3
$region0: #{detrhoi_forward.3}
  #allocation0 [shape = 'u32[]', space=smem, size = 0x4, offset = 0x4, fixed_abs, tag = 'smem constant byte address 0x4 - core index']
  #allocation1 [shape = 'u32[72,128]{1,0:T(1,128)}', space=vmem, size = 0x9000, scoped, tag = 'internal scratch']
  %s0 = inlined_call_operand.vmem [shape: bf16[6,16,32], index: 0, kind: input, shape index: {}]
  %s1 = inlined_call_operand.vmem [shape: bf16[6,32,120], index: 1, kind: input, shape index: {}]
  %s2 = inlined_call_operand.vmem [shape: f32[6,1,120], index: 2, kind: input, shape index: {}]
  %s3 = inlined_call_operand.vmem [shape: bf16[6,32,64], index: 3, kind: input, shape index: {}]
  %s4 = inlined_call_operand.vmem [shape: f32[6,1,64], index: 4, kind: input, shape index: {}]
  %s5 = inlined_call_operand.vmem [shape: bf16[6,32,32], index: 5, kind: input, shape index: {}]
  %s6 = inlined_call_operand.vmem [shape: f32[6,1,32], index: 6, kind: input, shape index: {}]
  %s7 = inlined_call_operand.vmem [shape: bf16[6,32,32], index: 7, kind: input, shape index: {}]
  %s8 = inlined_call_operand.vmem [shape: f32[6,1,32], index: 8, kind: input, shape index: {}]
  %s9 = inlined_call_operand.vmem [shape: bf16[6,32,8], index: 9, kind: input, shape index: {}]
  %s10 = inlined_call_operand.vmem [shape: f32[6,1,8], index: 10, kind: input, shape index: {}]
  %s11 = inlined_call_operand.vmem [shape: f32[6,16,128], index: 11, kind: output, shape index: {}]
  %s12 = sld [smem:[#allocation0]]
  $region77: #{detrhoi_forward.3} parent=0
    _
  %s14 = ssub.s32 1, %s12
  %s15 = scalar_select 0, %s14, %s12
  loop: start=0, step=1, limit=8
  $region2: #{detrhoi_forward.3} parent=0 // loop_pre_header
    _
  $region3: #{detrhoi_forward.3} parent=0 // loop_header
    %s17 = sphi 0, %s21
    %p18 = scmp.ge.s32.totalorder %s17, 8
    %s27 = sphi 0, %s29
    %s30 = sphi 0, %s27
    %s31 = sphi 0, %s30
    %s47 = sphi 0, %s31
    %s53 = sphi 0, %s55
    %s56 = sphi 0, %s53
    %s57 = sphi 0, %s56
    %s73 = sphi 0, %s57
    %s79 = sphi 0, %s81
    %s82 = sphi 0, %s79
    %s83 = sphi 0, %s82
    %s99 = sphi 0, %s83
    %s105 = sphi 0, %s107
    %s108 = sphi 0, %s105
    %s109 = sphi 0, %s108
    %s125 = sphi 0, %s109
    %s131 = sphi 0, %s133
    %s134 = sphi 0, %s131
    %s135 = sphi 0, %s134
    %s151 = sphi 0, %s135
    %s157 = sphi 0, %s159
    %s160 = sphi 0, %s157
    %s161 = sphi 0, %s160
    %s177 = sphi 0, %s161
    %s183 = sphi 0, %s185
    %s186 = sphi 0, %s183
    %s187 = sphi 0, %s186
    %s203 = sphi 0, %s187
    %s209 = sphi 0, %s211
    %s212 = sphi 0, %s209
    %s213 = sphi 0, %s212
    %s229 = sphi 0, %s213
    %s235 = sphi 0, %s237
    %s238 = sphi 0, %s235
    %s239 = sphi 0, %s238
    %s255 = sphi 0, %s239
    %s261 = sphi 0, %s263
    %s264 = sphi 0, %s261
    %s265 = sphi 0, %s264
    %s281 = sphi 0, %s265
    %s287 = sphi 0, %s289
    %s290 = sphi 0, %s287
    %s291 = sphi 0, %s290
    %s307 = sphi 0, %s291
    %s313 = sphi 0, %s315
    %s316 = sphi 0, %s313
    %s317 = sphi 0, %s316
    %s333 = sphi 0, %s317
  $region4: #{detrhoi_forward.3} parent=0 // loop_header_branch
    %20 = sbr.rel (%p18) target = $region8
  $region5: #{detrhoi_forward.3} parent=0 // loop_body
    %s22 = ssub.s32 %s17, 1
    %s23 = ssub.s32 %s17, 2
    %s24 = sadd.s32 %s17, 1
    %s25 = ssub.s32 %s17, %s24
    %p26 = scmp.eq.s32.totalorder %s25, 0
    %s28 = sadd.s32 %s27, 1
    %s29 = scalar_select %p26, %s27, %s28
    %p32 = pneg %p26
    %p33 = scmp.eq.s32.totalorder %s17, 5
    %p34 = por %p32, %p33
    %p35 = scmp.ne.s32.totalorder %s27, %s30
    %p36 = scmp.eq.s32.totalorder %s17, 0
    %p37 = por %p35, %p36
    %p38 = scmp.ne.s32.totalorder %s27, %s30
    %p39 = scmp.eq.s32.totalorder %s22, 5
    %p40 = por %p38, %p39
    %p41 = scmp.ne.s32.totalorder %s30, %s31
    %p42 = scmp.eq.s32.totalorder %s22, 0
    %p43 = por %p41, %p42
    %p44 = scmp.ne.s32.totalorder %s30, %s31
    %p45 = scmp.eq.s32.totalorder %s23, 5
    %p46 = por %p44, %p45
    %p48 = scmp.ne.s32.totalorder %s31, %s47
    %p49 = scmp.eq.s32.totalorder %s23, 0
    %p50 = por %p48, %p49
    %s51 = ssub.s32 %s17, %s24
    %p52 = scmp.eq.s32.totalorder %s51, 0
    %s54 = sadd.s32 %s53, 1
    %s55 = scalar_select %p52, %s53, %s54
    %p58 = pneg %p52
    %p59 = scmp.eq.s32.totalorder %s17, 5
    %p60 = por %p58, %p59
    %p61 = scmp.ne.s32.totalorder %s53, %s56
    %p62 = scmp.eq.s32.totalorder %s17, 0
    %p63 = por %p61, %p62
    %p64 = scmp.ne.s32.totalorder %s53, %s56
    %p65 = scmp.eq.s32.totalorder %s22, 5
    %p66 = por %p64, %p65
    %p67 = scmp.ne.s32.totalorder %s56, %s57
    %p68 = scmp.eq.s32.totalorder %s22, 0
    %p69 = por %p67, %p68
    %p70 = scmp.ne.s32.totalorder %s56, %s57
    %p71 = scmp.eq.s32.totalorder %s23, 5
    %p72 = por %p70, %p71
    %p74 = scmp.ne.s32.totalorder %s57, %s73
    %p75 = scmp.eq.s32.totalorder %s23, 0
    %p76 = por %p74, %p75
    %s77 = ssub.s32 %s17, %s24
    %p78 = scmp.eq.s32.totalorder %s77, 0
    %s80 = sadd.s32 %s79, 1
    %s81 = scalar_select %p78, %s79, %s80
    %p84 = pneg %p78
    %p85 = scmp.eq.s32.totalorder %s17, 5
    %p86 = por %p84, %p85
    %p87 = scmp.ne.s32.totalorder %s79, %s82
    %p88 = scmp.eq.s32.totalorder %s17, 0
    %p89 = por %p87, %p88
    %p90 = scmp.ne.s32.totalorder %s79, %s82
    %p91 = scmp.eq.s32.totalorder %s22, 5
    %p92 = por %p90, %p91
    %p93 = scmp.ne.s32.totalorder %s82, %s83
    %p94 = scmp.eq.s32.totalorder %s22, 0
    %p95 = por %p93, %p94
    %p96 = scmp.ne.s32.totalorder %s82, %s83
    %p97 = scmp.eq.s32.totalorder %s23, 5
    %p98 = por %p96, %p97
    %p100 = scmp.ne.s32.totalorder %s83, %s99
    %p101 = scmp.eq.s32.totalorder %s23, 0
    %p102 = por %p100, %p101
    %s103 = ssub.s32 %s17, %s24
    %p104 = scmp.eq.s32.totalorder %s103, 0
    %s106 = sadd.s32 %s105, 1
    %s107 = scalar_select %p104, %s105, %s106
    %p110 = pneg %p104
    %p111 = scmp.eq.s32.totalorder %s17, 5
    %p112 = por %p110, %p111
    %p113 = scmp.ne.s32.totalorder %s105, %s108
    %p114 = scmp.eq.s32.totalorder %s17, 0
    %p115 = por %p113, %p114
    %p116 = scmp.ne.s32.totalorder %s105, %s108
    %p117 = scmp.eq.s32.totalorder %s22, 5
    %p118 = por %p116, %p117
    %p119 = scmp.ne.s32.totalorder %s108, %s109
    %p120 = scmp.eq.s32.totalorder %s22, 0
    %p121 = por %p119, %p120
    %p122 = scmp.ne.s32.totalorder %s108, %s109
    %p123 = scmp.eq.s32.totalorder %s23, 5
    %p124 = por %p122, %p123
    %p126 = scmp.ne.s32.totalorder %s109, %s125
    %p127 = scmp.eq.s32.totalorder %s23, 0
    %p128 = por %p126, %p127
    %s129 = ssub.s32 %s17, %s24
    %p130 = scmp.eq.s32.totalorder %s129, 0
    %s132 = sadd.s32 %s131, 1
    %s133 = scalar_select %p130, %s131, %s132
    %p136 = pneg %p130
    %p137 = scmp.eq.s32.totalorder %s17, 5
    %p138 = por %p136, %p137
    %p139 = scmp.ne.s32.totalorder %s131, %s134
    %p140 = scmp.eq.s32.totalorder %s17, 0
    %p141 = por %p139, %p140
    %p142 = scmp.ne.s32.totalorder %s131, %s134
    %p143 = scmp.eq.s32.totalorder %s22, 5
    %p144 = por %p142, %p143
    %p145 = scmp.ne.s32.totalorder %s134, %s135
    %p146 = scmp.eq.s32.totalorder %s22, 0
    %p147 = por %p145, %p146
    %p148 = scmp.ne.s32.totalorder %s134, %s135
    %p149 = scmp.eq.s32.totalorder %s23, 5
    %p150 = por %p148, %p149
    %p152 = scmp.ne.s32.totalorder %s135, %s151
    %p153 = scmp.eq.s32.totalorder %s23, 0
    %p154 = por %p152, %p153
    %s155 = ssub.s32 %s17, %s24
    %p156 = scmp.eq.s32.totalorder %s155, 0
    %s158 = sadd.s32 %s157, 1
    %s159 = scalar_select %p156, %s157, %s158
    %p162 = pneg %p156
    %p163 = scmp.eq.s32.totalorder %s17, 5
    %p164 = por %p162, %p163
    %p165 = scmp.ne.s32.totalorder %s157, %s160
    %p166 = scmp.eq.s32.totalorder %s17, 0
    %p167 = por %p165, %p166
    %p168 = scmp.ne.s32.totalorder %s157, %s160
    %p169 = scmp.eq.s32.totalorder %s22, 5
    %p170 = por %p168, %p169
    %p171 = scmp.ne.s32.totalorder %s160, %s161
    %p172 = scmp.eq.s32.totalorder %s22, 0
    %p173 = por %p171, %p172
    %p174 = scmp.ne.s32.totalorder %s160, %s161
    %p175 = scmp.eq.s32.totalorder %s23, 5
    %p176 = por %p174, %p175
    %p178 = scmp.ne.s32.totalorder %s161, %s177
    %p179 = scmp.eq.s32.totalorder %s23, 0
    %p180 = por %p178, %p179
    %s181 = ssub.s32 %s17, %s24
    %p182 = scmp.eq.s32.totalorder %s181, 0
    %s184 = sadd.s32 %s183, 1
    %s185 = scalar_select %p182, %s183, %s184
    %p188 = pneg %p182
    %p189 = scmp.eq.s32.totalorder %s17, 5
    %p190 = por %p188, %p189
    %p191 = scmp.ne.s32.totalorder %s183, %s186
    %p192 = scmp.eq.s32.totalorder %s17, 0
    %p193 = por %p191, %p192
    %p194 = scmp.ne.s32.totalorder %s183, %s186
    %p195 = scmp.eq.s32.totalorder %s22, 5
    %p196 = por %p194, %p195
    %p197 = scmp.ne.s32.totalorder %s186, %s187
    %p198 = scmp.eq.s32.totalorder %s22, 0
    %p199 = por %p197, %p198
    %p200 = scmp.ne.s32.totalorder %s186, %s187
    %p201 = scmp.eq.s32.totalorder %s23, 5
    %p202 = por %p200, %p201
    %p204 = scmp.ne.s32.totalorder %s187, %s203
    %p205 = scmp.eq.s32.totalorder %s23, 0
    %p206 = por %p204, %p205
    %s207 = ssub.s32 %s17, %s24
    %p208 = scmp.eq.s32.totalorder %s207, 0
    %s210 = sadd.s32 %s209, 1
    %s211 = scalar_select %p208, %s209, %s210
    %p214 = pneg %p208
    %p215 = scmp.eq.s32.totalorder %s17, 5
    %p216 = por %p214, %p215
    %p217 = scmp.ne.s32.totalorder %s209, %s212
    %p218 = scmp.eq.s32.totalorder %s17, 0
    %p219 = por %p217, %p218
    %p220 = scmp.ne.s32.totalorder %s209, %s212
    %p221 = scmp.eq.s32.totalorder %s22, 5
    %p222 = por %p220, %p221
    %p223 = scmp.ne.s32.totalorder %s212, %s213
    %p224 = scmp.eq.s32.totalorder %s22, 0
    %p225 = por %p223, %p224
    %p226 = scmp.ne.s32.totalorder %s212, %s213
    %p227 = scmp.eq.s32.totalorder %s23, 5
    %p228 = por %p226, %p227
    %p230 = scmp.ne.s32.totalorder %s213, %s229
    %p231 = scmp.eq.s32.totalorder %s23, 0
    %p232 = por %p230, %p231
    %s233 = ssub.s32 %s17, %s24
    %p234 = scmp.eq.s32.totalorder %s233, 0
    %s236 = sadd.s32 %s235, 1
    %s237 = scalar_select %p234, %s235, %s236
    %p240 = pneg %p234
    %p241 = scmp.eq.s32.totalorder %s17, 5
    %p242 = por %p240, %p241
    %p243 = scmp.ne.s32.totalorder %s235, %s238
    %p244 = scmp.eq.s32.totalorder %s17, 0
    %p245 = por %p243, %p244
    %p246 = scmp.ne.s32.totalorder %s235, %s238
    %p247 = scmp.eq.s32.totalorder %s22, 5
    %p248 = por %p246, %p247
    %p249 = scmp.ne.s32.totalorder %s238, %s239
    %p250 = scmp.eq.s32.totalorder %s22, 0
    %p251 = por %p249, %p250
    %p252 = scmp.ne.s32.totalorder %s238, %s239
    %p253 = scmp.eq.s32.totalorder %s23, 5
    %p254 = por %p252, %p253
    %p256 = scmp.ne.s32.totalorder %s239, %s255
    %p257 = scmp.eq.s32.totalorder %s23, 0
    %p258 = por %p256, %p257
    %s259 = ssub.s32 %s17, %s24
    %p260 = scmp.eq.s32.totalorder %s259, 0
    %s262 = sadd.s32 %s261, 1
    %s263 = scalar_select %p260, %s261, %s262
    %p266 = pneg %p260
    %p267 = scmp.eq.s32.totalorder %s17, 5
    %p268 = por %p266, %p267
    %p269 = scmp.ne.s32.totalorder %s261, %s264
    %p270 = scmp.eq.s32.totalorder %s17, 0
    %p271 = por %p269, %p270
    %p272 = scmp.ne.s32.totalorder %s261, %s264
    %p273 = scmp.eq.s32.totalorder %s22, 5
    %p274 = por %p272, %p273
    %p275 = scmp.ne.s32.totalorder %s264, %s265
    %p276 = scmp.eq.s32.totalorder %s22, 0
    %p277 = por %p275, %p276
    %p278 = scmp.ne.s32.totalorder %s264, %s265
    %p279 = scmp.eq.s32.totalorder %s23, 5
    %p280 = por %p278, %p279
    %p282 = scmp.ne.s32.totalorder %s265, %s281
    %p283 = scmp.eq.s32.totalorder %s23, 0
    %p284 = por %p282, %p283
    %s285 = ssub.s32 %s17, %s24
    %p286 = scmp.eq.s32.totalorder %s285, 0
    %s288 = sadd.s32 %s287, 1
    %s289 = scalar_select %p286, %s287, %s288
    %p292 = pneg %p286
    %p293 = scmp.eq.s32.totalorder %s17, 5
    %p294 = por %p292, %p293
    %p295 = scmp.ne.s32.totalorder %s287, %s290
    %p296 = scmp.eq.s32.totalorder %s17, 0
    %p297 = por %p295, %p296
    %p298 = scmp.ne.s32.totalorder %s287, %s290
    %p299 = scmp.eq.s32.totalorder %s22, 5
    %p300 = por %p298, %p299
    %p301 = scmp.ne.s32.totalorder %s290, %s291
    %p302 = scmp.eq.s32.totalorder %s22, 0
    %p303 = por %p301, %p302
    %p304 = scmp.ne.s32.totalorder %s290, %s291
    %p305 = scmp.eq.s32.totalorder %s23, 5
    %p306 = por %p304, %p305
    %p308 = scmp.ne.s32.totalorder %s291, %s307
    %p309 = scmp.eq.s32.totalorder %s23, 0
    %p310 = por %p308, %p309
    %s311 = ssub.s32 %s17, %s24
    %p312 = scmp.eq.s32.totalorder %s311, 0
    %s314 = sadd.s32 %s313, 1
    %s315 = scalar_select %p312, %s313, %s314
    %p318 = pneg %p312
    %p319 = scmp.eq.s32.totalorder %s17, 5
    %p320 = por %p318, %p319
    %p321 = scmp.ne.s32.totalorder %s313, %s316
    %p322 = scmp.eq.s32.totalorder %s17, 0
    %p323 = por %p321, %p322
    %p324 = scmp.ne.s32.totalorder %s313, %s316
    %p325 = scmp.eq.s32.totalorder %s22, 5
    %p326 = por %p324, %p325
    %p327 = scmp.ne.s32.totalorder %s316, %s317
    %p328 = scmp.eq.s32.totalorder %s22, 0
    %p329 = por %p327, %p328
    %p330 = scmp.ne.s32.totalorder %s316, %s317
    %p331 = scmp.eq.s32.totalorder %s23, 5
    %p332 = por %p330, %p331
    %p334 = scmp.ne.s32.totalorder %s317, %s333
    %p335 = scmp.eq.s32.totalorder %s23, 0
    %p336 = por %p334, %p335
    %p337 = scmp.le.s32.totalorder 1, %s17
    %p338 = scmp.lt.s32.totalorder %s17, 7
    %p339 = pnand %p337, %p338
    %p340 = pneg %p339
    // Predicated region
    $region9: #{detrhoi_forward.3} parent=5 // pred_check
      _
    $region10: #{detrhoi_forward.3} parent=5 // pred_check_branch
      %342 = sbr.rel (%p339) target = $region12
    $region11: #{detrhoi_forward.3} parent=5 // pred_region
      %s343 = ssub.s32 %s17, 1
    $region12: #{detrhoi_forward.3} parent=5 // pred_fallthru
      _
    %p344 = scmp.lt.s32.totalorder %s17, 6
    // Predicated region
    $region13: #{detrhoi_forward.3} parent=5 // pred_check
      %p345 = pneg %p344
    $region14: #{detrhoi_forward.3} parent=5 // pred_check_branch
      %347 = sbr.rel (%p345) target = $region16
    $region15: #{detrhoi_forward.3} parent=5 // pred_region
      // Predicated region
      $region17: #{detrhoi_forward.3} parent=15 // pred_check
        %p348 = pneg %p37
      $region18: #{detrhoi_forward.3} parent=15 // pred_check_branch
        %350 = sbr.rel (%p348) target = $region20
      $region19: #{detrhoi_forward.3} parent=15 // pred_region
        %p351 = scmp.lt.s32.totalorder %s17, 5
        %s352 = scalar_select %p351, %s17, 5
        %s353 = smul.addr %s352, 2
        %s354 = smul.addr %s353, 4
        %s355 = scalar_lea.vmem %s0, %s354
      $region20: #{detrhoi_forward.3} parent=15 // pred_fallthru
        _
      // Predicated region
      $region21: #{detrhoi_forward.3} parent=15 // pred_check
        %p356 = pneg %p63
      $region22: #{detrhoi_forward.3} parent=15 // pred_check_branch
        %358 = sbr.rel (%p356) target = $region24
      $region23: #{detrhoi_forward.3} parent=15 // pred_region
        %p359 = scmp.lt.s32.totalorder %s17, 5
        %s360 = scalar_select %p359, %s17, 5
        %s361 = smul.addr %s360, 4
        %s362 = smul.addr %s361, 4
        %s363 = scalar_lea.vmem %s1, %s362
      $region24: #{detrhoi_forward.3} parent=15 // pred_fallthru
        _
      // Predicated region
      $region25: #{detrhoi_forward.3} parent=15 // pred_check
        %p364 = pneg %p89
      $region26: #{detrhoi_forward.3} parent=15 // pred_check_branch
        %366 = sbr.rel (%p364) target = $region28
      $region27: #{detrhoi_forward.3} parent=15 // pred_region
        %p367 = scmp.lt.s32.totalorder %s17, 5
        %s368 = scalar_select %p367, %s17, 5
        %s369 = scalar_lea.vmem %s2, %s368
      $region28: #{detrhoi_forward.3} parent=15 // pred_fallthru
        _
      // Predicated region
      $region29: #{detrhoi_forward.3} parent=15 // pred_check
        %p370 = pneg %p115
      $region30: #{detrhoi_forward.3} parent=15 // pred_check_branch
        %372 = sbr.rel (%p370) target = $region32
      $region31: #{detrhoi_forward.3} parent=15 // pred_region
        %p373 = scmp.lt.s32.totalorder %s17, 5
        %s374 = scalar_select %p373, %s17, 5
        %s375 = smul.addr %s374, 4
        %s376 = smul.addr %s375, 4
        %s377 = scalar_lea.vmem %s3, %s376
      $region32: #{detrhoi_forward.3} parent=15 // pred_fallthru
        _
      // Predicated region
      $region33: #{detrhoi_forward.3} parent=15 // pred_check
        %p378 = pneg %p141
      $region34: #{detrhoi_forward.3} parent=15 // pred_check_branch
        %380 = sbr.rel (%p378) target = $region36
      $region35: #{detrhoi_forward.3} parent=15 // pred_region
        %p381 = scmp.lt.s32.totalorder %s17, 5
        %s382 = scalar_select %p381, %s17, 5
        %s383 = scalar_lea.vmem %s4, %s382
      $region36: #{detrhoi_forward.3} parent=15 // pred_fallthru
        _
      // Predicated region
      $region37: #{detrhoi_forward.3} parent=15 // pred_check
        %p384 = pneg %p167
      $region38: #{detrhoi_forward.3} parent=15 // pred_check_branch
        %386 = sbr.rel (%p384) target = $region40
      $region39: #{detrhoi_forward.3} parent=15 // pred_region
        %p387 = scmp.lt.s32.totalorder %s17, 5
        %s388 = scalar_select %p387, %s17, 5
        %s389 = smul.addr %s388, 4
        %s390 = smul.addr %s389, 4
        %s391 = scalar_lea.vmem %s5, %s390
      $region40: #{detrhoi_forward.3} parent=15 // pred_fallthru
        _
      // Predicated region
      $region41: #{detrhoi_forward.3} parent=15 // pred_check
        %p392 = pneg %p193
      $region42: #{detrhoi_forward.3} parent=15 // pred_check_branch
        %394 = sbr.rel (%p392) target = $region44
      $region43: #{detrhoi_forward.3} parent=15 // pred_region
        %p395 = scmp.lt.s32.totalorder %s17, 5
        %s396 = scalar_select %p395, %s17, 5
        %s397 = scalar_lea.vmem %s6, %s396
      $region44: #{detrhoi_forward.3} parent=15 // pred_fallthru
        _
      // Predicated region
      $region45: #{detrhoi_forward.3} parent=15 // pred_check
        %p398 = pneg %p219
      $region46: #{detrhoi_forward.3} parent=15 // pred_check_branch
        %400 = sbr.rel (%p398) target = $region48
      $region47: #{detrhoi_forward.3} parent=15 // pred_region
        %p401 = scmp.lt.s32.totalorder %s17, 5
        %s402 = scalar_select %p401, %s17, 5
        %s403 = smul.addr %s402, 4
        %s404 = smul.addr %s403, 4
        %s405 = scalar_lea.vmem %s7, %s404
      $region48: #{detrhoi_forward.3} parent=15 // pred_fallthru
        _
      // Predicated region
      $region49: #{detrhoi_forward.3} parent=15 // pred_check
        %p406 = pneg %p245
      $region50: #{detrhoi_forward.3} parent=15 // pred_check_branch
        %408 = sbr.rel (%p406) target = $region52
      $region51: #{detrhoi_forward.3} parent=15 // pred_region
        %p409 = scmp.lt.s32.totalorder %s17, 5
        %s410 = scalar_select %p409, %s17, 5
        %s411 = scalar_lea.vmem %s8, %s410
      $region52: #{detrhoi_forward.3} parent=15 // pred_fallthru
        _
      // Predicated region
      $region53: #{detrhoi_forward.3} parent=15 // pred_check
        %p412 = pneg %p271
      $region54: #{detrhoi_forward.3} parent=15 // pred_check_branch
        %414 = sbr.rel (%p412) target = $region56
      $region55: #{detrhoi_forward.3} parent=15 // pred_region
        %p415 = scmp.lt.s32.totalorder %s17, 5
        %s416 = scalar_select %p415, %s17, 5
        %s417 = smul.addr %s416, 4
        %s418 = smul.addr %s417, 4
        %s419 = scalar_lea.vmem %s9, %s418
      $region56: #{detrhoi_forward.3} parent=15 // pred_fallthru
        _
      // Predicated region
      $region57: #{detrhoi_forward.3} parent=15 // pred_check
        %p420 = pneg %p297
      $region58: #{detrhoi_forward.3} parent=15 // pred_check_branch
        %422 = sbr.rel (%p420) target = $region60
      $region59: #{detrhoi_forward.3} parent=15 // pred_region
        %p423 = scmp.lt.s32.totalorder %s17, 5
        %s424 = scalar_select %p423, %s17, 5
        %s425 = scalar_lea.vmem %s10, %s424
      $region60: #{detrhoi_forward.3} parent=15 // pred_fallthru
        _
    $region16: #{detrhoi_forward.3} parent=5 // pred_fallthru
      _
    %p426 = scmp.le.s32.totalorder 1, %s17
    %p427 = scmp.lt.s32.totalorder %s17, 7
    %p428 = pnand %p426, %p427
    %p429 = pneg %p428
    // Predicated region
    $region61: #{detrhoi_forward.3} parent=5 // pred_check
      _
    $region62: #{detrhoi_forward.3} parent=5 // pred_check_branch
      %431 = sbr.rel (%p428) target = $region64
    $region63: #{detrhoi_forward.3} parent=5 // pred_region
      %s432 = ssub.s32 %s17, 1
      %p433 = scmp.lt.s32.totalorder %s22, 5
      %s434 = scalar_select %p433, %s22, 5
      %s435 = smul.addr %s434, 2
      %s436 = smul.addr %s435, 4
      %s437 = scalar_lea.vmem %s0, %s436
      %p438 = pneg %p43
      %p439 = pneg %p40
      %p440 = scmp.lt.s32.totalorder %s22, 5
      %s441 = scalar_select %p440, %s22, 5
      %s442 = smul.addr %s441, 4
      %s443 = smul.addr %s442, 4
      %s444 = scalar_lea.vmem %s1, %s443
      %p445 = pneg %p69
      %p446 = pneg %p66
      %p447 = scmp.lt.s32.totalorder %s22, 5
      %s448 = scalar_select %p447, %s22, 5
      %s449 = scalar_lea.vmem %s2, %s448
      %p450 = pneg %p95
      %p451 = pneg %p92
      %p452 = scmp.lt.s32.totalorder %s22, 5
      %s453 = scalar_select %p452, %s22, 5
      %s454 = smul.addr %s453, 4
      %s455 = smul.addr %s454, 4
      %s456 = scalar_lea.vmem %s3, %s455
      %p457 = pneg %p121
      %p458 = pneg %p118
      %p459 = scmp.lt.s32.totalorder %s22, 5
      %s460 = scalar_select %p459, %s22, 5
      %s461 = scalar_lea.vmem %s4, %s460
      %p462 = pneg %p147
      %p463 = pneg %p144
      %p464 = scmp.lt.s32.totalorder %s22, 5
      %s465 = scalar_select %p464, %s22, 5
      %s466 = smul.addr %s465, 4
      %s467 = smul.addr %s466, 4
      %s468 = scalar_lea.vmem %s5, %s467
      %p469 = pneg %p173
      %p470 = pneg %p170
      %p471 = scmp.lt.s32.totalorder %s22, 5
      %s472 = scalar_select %p471, %s22, 5
      %s473 = scalar_lea.vmem %s6, %s472
      %p474 = pneg %p199
      %p475 = pneg %p196
      %p476 = scmp.lt.s32.totalorder %s22, 5
      %s477 = scalar_select %p476, %s22, 5
      %s478 = smul.addr %s477, 4
      %s479 = smul.addr %s478, 4
      %s480 = scalar_lea.vmem %s7, %s479
      %p481 = pneg %p225
      %p482 = pneg %p222
      %p483 = scmp.lt.s32.totalorder %s22, 5
      %s484 = scalar_select %p483, %s22, 5
      %s485 = scalar_lea.vmem %s8, %s484
      %p486 = pneg %p251
      %p487 = pneg %p248
      %p488 = scmp.lt.s32.totalorder %s22, 5
      %s489 = scalar_select %p488, %s22, 5
      %s490 = smul.addr %s489, 4
      %s491 = smul.addr %s490, 4
      %s492 = scalar_lea.vmem %s9, %s491
      %p493 = pneg %p277
      %p494 = pneg %p274
      %p495 = scmp.lt.s32.totalorder %s22, 5
      %s496 = scalar_select %p495, %s22, 5
      %s497 = scalar_lea.vmem %s10, %s496
      %p498 = pneg %p303
      %p499 = pneg %p300
      %p500 = pneg %p329
      %p501 = pneg %p326
      %p502 = scmp.lt.s32.totalorder %s22, 5
      %s503 = scalar_select %p502, %s22, 5
      %s504 = smul.addr %s503, 2
      %s505 = smul.addr %s504, 8
      %s506 = scalar_lea.vmem %s11, %s505
      %p507 = scmp.lt.s32.totalorder %s22, 5
      %s508 = scalar_select %p507, %s22, 5
      %s509 = smul.addr %s508, 2
      %s510 = smul.addr %s509, 4
      %s511 = scalar_lea.vmem %s0, %s510
      %p512 = scmp.lt.s32.totalorder %s22, 5
      %s513 = scalar_select %p512, %s22, 5
      %s514 = smul.addr %s513, 4
      %s515 = smul.addr %s514, 4
      %s516 = scalar_lea.vmem %s1, %s515
      %p517 = scmp.lt.s32.totalorder %s22, 5
      %s518 = scalar_select %p517, %s22, 5
      %s519 = scalar_lea.vmem %s2, %s518
      %p520 = scmp.lt.s32.totalorder %s22, 5
      %s521 = scalar_select %p520, %s22, 5
      %s522 = smul.addr %s521, 4
      %s523 = smul.addr %s522, 4
      %s524 = scalar_lea.vmem %s3, %s523
      %p525 = scmp.lt.s32.totalorder %s22, 5
      %s526 = scalar_select %p525, %s22, 5
      %s527 = scalar_lea.vmem %s4, %s526
      %p528 = scmp.lt.s32.totalorder %s22, 5
      %s529 = scalar_select %p528, %s22, 5
      %s530 = smul.addr %s529, 4
      %s531 = smul.addr %s530, 4
      %s532 = scalar_lea.vmem %s5, %s531
      %p533 = scmp.lt.s32.totalorder %s22, 5
      %s534 = scalar_select %p533, %s22, 5
      %s535 = scalar_lea.vmem %s6, %s534
      %p536 = scmp.lt.s32.totalorder %s22, 5
      %s537 = scalar_select %p536, %s22, 5
      %s538 = smul.addr %s537, 4
      %s539 = smul.addr %s538, 4
      %s540 = scalar_lea.vmem %s7, %s539
      %p541 = scmp.lt.s32.totalorder %s22, 5
      %s542 = scalar_select %p541, %s22, 5
      %s543 = scalar_lea.vmem %s8, %s542
      %p544 = scmp.lt.s32.totalorder %s22, 5
      %s545 = scalar_select %p544, %s22, 5
      %s546 = smul.addr %s545, 4
      %s547 = smul.addr %s546, 4
      %s548 = scalar_lea.vmem %s9, %s547
      %p549 = scmp.lt.s32.totalorder %s22, 5
      %s550 = scalar_select %p549, %s22, 5
      %s551 = scalar_lea.vmem %s10, %s550
      %p552 = scmp.lt.s32.totalorder %s22, 5
      %s553 = scalar_select %p552, %s22, 5
      %s554 = smul.addr %s553, 2
      %s555 = smul.addr %s554, 8
      %s556 = scalar_lea.vmem %s11, %s555
      %v558 = vld [vmem:[%s511] sm:$0xf]
      %v559 = vld [vmem:[%s511 + $0x4] sm:$0xf]
      %v560 = vld [vmem:[%s516] sm:$0xf]
      %v561 = vld [vmem:[%s516 + $0x4] sm:$0xf]
      %v562 = vld [vmem:[%s516 + $0x8] sm:$0xf]
      %v563 = vld [vmem:[%s516 + $0xc] sm:$0xf]
      %v564 = vld [vmem:[%s519] sm:$0x1]
      %v566 = vperm.slane %v564, 0
      %v570 = vunpack.c.l.b16 %v558
      %v571 = vunpack.c.l.b16 %v559
      %v572 = vpack.c.b16 %v571, %v570
      %v577 = vunpack.c.l.b16 %v560
      %v578 = vunpack.c.l.b16 %v561
      %v579 = vunpack.c.l.b16 %v562
      %v580 = vunpack.c.l.b16 %v563
      %v581 = vpack.c.b16 %v578, %v577
      %v582 = vpack.c.b16 %v580, %v579
      %vm585 = vcmask 261120
      %v587 = vsel %vm585, %v572, 0
      %589 = vmatpush.bf16.msra.mxu0 0
      %590 = vmatpush.bf16.msra.mxu0 0
      %591 = vmatpush.bf16.msra.mxu0 0
      %592 = vmatpush.bf16.msra.mxu0 0
      %593 = vmatpush.bf16.msra.mxu0 0
      %594 = vmatpush.bf16.msra.mxu0 0
      %595 = vmatpush.bf16.msra.mxu0 %v582
      %596 = vmatpush.bf16.msra.mxu0 %v581
      %597 = vmatmul.bf16.gmra.mxu0 %v587
      %v598 = vpop.f32.mrf.mxu0
      %v599 = vadd.f32 %v566, %v598
      %v600 = vpop.f32.mrf.mxu0
      %v601 = vadd.f32 %v566, %v600
      %602 = vdwg.mxu0
      %v603 = vld [vmem:[%s524] sm:$0xf]
      %v604 = vld [vmem:[%s524 + $0x4] sm:$0xf]
      %v605 = vld [vmem:[%s524 + $0x8] sm:$0xf]
      %v606 = vld [vmem:[%s524 + $0xc] sm:$0xf]
      %v607 = vld [vmem:[%s527] sm:$0x1]
      %v609 = vperm.slane %v607, 0
      %v615 = vunpack.c.l.b16 %v603
      %v616 = vunpack.c.l.b16 %v604
      %v617 = vunpack.c.l.b16 %v605
      %v618 = vunpack.c.l.b16 %v606
      %v619 = vpack.c.b16 %v616, %v615
      %v620 = vpack.c.b16 %v618, %v617
      %623 = vmatpush.bf16.msra.mxu0 0
      %624 = vmatpush.bf16.msra.mxu0 0
      %625 = vmatpush.bf16.msra.mxu0 0
      %626 = vmatpush.bf16.msra.mxu0 0
      %627 = vmatpush.bf16.msra.mxu0 0
      %628 = vmatpush.bf16.msra.mxu0 0
      %629 = vmatpush.bf16.msra.mxu0 %v620
      %630 = vmatpush.bf16.msra.mxu0 %v619
      %631 = vmatmul.bf16.gmra.mxu0 %v587
      %v632 = vpop.f32.mrf.mxu0
      %v633 = vadd.f32 %v609, %v632
      %v634 = vpop.f32.mrf.mxu0
      %v635 = vadd.f32 %v609, %v634
      %636 = vdwg.mxu0
      %v637 = vmax.f32 %v633, 0.0
      %v638 = vmax.f32 %v635, 0.0
      %v639 = vpack.c.bf16 %v637, %v637
      %v640 = vpack.c.bf16 %v638, %v638
      %v641 = vld [vmem:[%s532] sm:$0xf]
      %v642 = vld [vmem:[%s532 + $0x4] sm:$0xf]
      %v643 = vld [vmem:[%s532 + $0x8] sm:$0xf]
      %v644 = vld [vmem:[%s532 + $0xc] sm:$0xf]
      %v645 = vld [vmem:[%s535] sm:$0x1]
      %v647 = vperm.slane %v645, 0
      %v651 = vunpack.c.l.b16 %v639
      %v652 = vunpack.c.l.b16 %v640
      %v653 = vpack.c.b16 %v652, %v651
      %v658 = vunpack.c.l.b16 %v641
      %v659 = vunpack.c.l.b16 %v642
      %v660 = vunpack.c.l.b16 %v643
      %v661 = vunpack.c.l.b16 %v644
      %v662 = vpack.c.b16 %v659, %v658
      %v663 = vpack.c.b16 %v661, %v660
      %v667 = vsel %vm585, %v653, 0
      %669 = vmatpush.bf16.msra.mxu0 0
      %670 = vmatpush.bf16.msra.mxu0 0
      %671 = vmatpush.bf16.msra.mxu0 0
      %672 = vmatpush.bf16.msra.mxu0 0
      %673 = vmatpush.bf16.msra.mxu0 0
      %674 = vmatpush.bf16.msra.mxu0 0
      %675 = vmatpush.bf16.msra.mxu0 %v663
      %676 = vmatpush.bf16.msra.mxu0 %v662
      %677 = vmatmul.bf16.gmra.mxu0 %v667
      %v678 = vpop.f32.mrf.mxu0
      %v679 = vadd.f32 %v647, %v678
      %v680 = vpop.f32.mrf.mxu0
      %v681 = vadd.f32 %v647, %v680
      %682 = vdwg.mxu0
      %v683 = vmax.f32 %v679, 0.0
      %v684 = vmax.f32 %v681, 0.0
      %v685 = vpack.c.bf16 %v683, %v683
      %v686 = vpack.c.bf16 %v684, %v684
      %v687 = vld [vmem:[%s540] sm:$0xf]
      %v688 = vld [vmem:[%s540 + $0x4] sm:$0xf]
      %v689 = vld [vmem:[%s540 + $0x8] sm:$0xf]
      %v690 = vld [vmem:[%s540 + $0xc] sm:$0xf]
      %v691 = vld [vmem:[%s543] sm:$0x1]
      %v693 = vperm.slane %v691, 0
      %695 = vrot.lane.b32.xlu0 %v653, 96
      %v696 = vpop.permute.xlu0 %695
      %v701 = vunpack.c.l.b16 %v687
      %v702 = vunpack.c.l.b16 %v688
      %v703 = vunpack.c.l.b16 %v689
      %v704 = vunpack.c.l.b16 %v690
      %v705 = vpack.c.b16 %v702, %v701
      %v706 = vpack.c.b16 %v704, %v703
      %v710 = vsel %vm585, %v696, 0
      %712 = vmatpush.bf16.msra.mxu0 0
      %713 = vmatpush.bf16.msra.mxu0 0
      %714 = vmatpush.bf16.msra.mxu0 0
      %715 = vmatpush.bf16.msra.mxu0 0
      %716 = vmatpush.bf16.msra.mxu0 0
      %717 = vmatpush.bf16.msra.mxu0 0
      %718 = vmatpush.bf16.msra.mxu0 %v706
      %719 = vmatpush.bf16.msra.mxu0 %v705
      %720 = vmatmul.bf16.gmra.mxu0 %v710
      %v721 = vpop.f32.mrf.mxu0
      %v722 = vadd.f32 %v693, %v721
      %v723 = vpop.f32.mrf.mxu0
      %v724 = vadd.f32 %v693, %v723
      %725 = vdwg.mxu0
      %v726 = vmax.f32 %v722, 0.0
      %v727 = vmax.f32 %v724, 0.0
      %v728 = vpack.c.bf16 %v726, %v726
      %v729 = vpack.c.bf16 %v727, %v727
      %v732 = vunpack.c.l.b16 %v685
      %v733 = vunpack.c.l.b16 %v686
      %v734 = vpack.c.b16 %v733, %v732
      %v737 = vunpack.c.l.b16 %v728
      %v738 = vunpack.c.l.b16 %v729
      %v739 = vpack.c.b16 %v738, %v737
      %v740 = vld [vmem:[%s548] sm:$0xf]
      %v741 = vld [vmem:[%s548 + $0x4] sm:$0xf]
      %v742 = vld [vmem:[%s548 + $0x8] sm:$0xf]
      %v743 = vld [vmem:[%s548 + $0xc] sm:$0xf]
      %v744 = vld [vmem:[%s551] sm:$0x1]
      %v746 = vperm.slane %v744, 0
      %v752 = vunpack.c.l.b16 %v740
      %v753 = vunpack.c.l.b16 %v741
      %v754 = vunpack.c.l.b16 %v742
      %v755 = vunpack.c.l.b16 %v743
      %v756 = vpack.c.b16 %v753, %v752
      %v757 = vpack.c.b16 %v755, %v754
      %v761 = vsel %vm585, %v734, 0
      %v764 = vsel %vm585, %v739, 0
      %766 = vmatpush.bf16.msra.mxu0 0
      %767 = vmatpush.bf16.msra.mxu0 0
      %768 = vmatpush.bf16.msra.mxu0 0
      %769 = vmatpush.bf16.msra.mxu0 0
      %770 = vmatpush.bf16.msra.mxu0 0
      %771 = vmatpush.bf16.msra.mxu0 0
      %772 = vmatpush.bf16.msra.mxu0 %v757
      %773 = vmatpush.bf16.msra.mxu0 %v756
      %774 = vmatmul.bf16.gmra.mxu0 %v761
      %v775 = vpop.f32.mrf.mxu0
      %v776 = vadd.f32 %v746, %v775
      %v777 = vpop.f32.mrf.mxu0
      %v778 = vadd.f32 %v746, %v777
      %779 = vmatmul.bf16.gmra.mxu0 %v764
      %v780 = vpop.f32.mrf.mxu0
      %v781 = vadd.f32 %v746, %v780
      %v782 = vpop.f32.mrf.mxu0
      %v783 = vadd.f32 %v746, %v782
      %784 = vdwg.mxu0
      %v785 = vxor.u32 %v776, 2147483648
      %v786 = vxor.u32 %v778, 2147483648
      %v787 = vmul.f32 %v785, 1.442695
      %v788 = vpow.pop %v787
      %v789 = vmul.f32 %v786, 1.442695
      %v790 = vpow.pop %v789
      %v791 = vadd.f32 %v788, 1.0
      %v792 = vadd.f32 %v790, 1.0
      %v793 = vrcp.pop %v791
      %v794 = vmul.f32 %v791, %v793
      %v795 = vsub.f32 1.0, %v794
      %v796 = vmul.f32 %v793, %v795
      %v797 = vadd.f32 %v793, %v796
      %vm798 = vweird.f32 %v791
      %vm799 = vweird.f32 %v793
      %vm800 = vmor %vm798, %vm799
      %v801 = vsel %vm800, %v793, %v797
      %v802 = vand.u32 2147483647, %v791
      %vm803 = vcmp.eq.f32.partialorder %v802, 8.507059e+37
      %v804 = vand.u32 %v791, 2147483648
      %v805 = vor.u32 1.1754944e-38, %v804
      %v806 = vsel %vm803, %v805, %v801
      %v807 = vmul.f32 1.0, %v806
      %v808 = vrcp.pop %v792
      %v809 = vmul.f32 %v792, %v808
      %v810 = vsub.f32 1.0, %v809
      %v811 = vmul.f32 %v808, %v810
      %v812 = vadd.f32 %v808, %v811
      %vm813 = vweird.f32 %v792
      %vm814 = vweird.f32 %v808
      %vm815 = vmor %vm813, %vm814
      %v816 = vsel %vm815, %v808, %v812
      %v817 = vand.u32 2147483647, %v792
      %vm818 = vcmp.eq.f32.partialorder %v817, 8.507059e+37
      %v819 = vand.u32 %v792, 2147483648
      %v820 = vor.u32 1.1754944e-38, %v819
      %v821 = vsel %vm818, %v820, %v816
      %v822 = vmul.f32 1.0, %v821
      %v823 = vxor.u32 %v781, 2147483648
      %v824 = vxor.u32 %v783, 2147483648
      %v825 = vmul.f32 %v823, 1.442695
      %v826 = vpow.pop %v825
      %v827 = vmul.f32 %v824, 1.442695
      %v828 = vpow.pop %v827
      %v829 = vadd.f32 %v826, 1.0
      %v830 = vadd.f32 %v828, 1.0
      %v831 = vrcp.pop %v829
      %v832 = vmul.f32 %v829, %v831
      %v833 = vsub.f32 1.0, %v832
      %v834 = vmul.f32 %v831, %v833
      %v835 = vadd.f32 %v831, %v834
      %vm836 = vweird.f32 %v829
      %vm837 = vweird.f32 %v831
      %vm838 = vmor %vm836, %vm837
      %v839 = vsel %vm838, %v831, %v835
      %v840 = vand.u32 2147483647, %v829
      %vm841 = vcmp.eq.f32.partialorder %v840, 8.507059e+37
      %v842 = vand.u32 %v829, 2147483648
      %v843 = vor.u32 1.1754944e-38, %v842
      %v844 = vsel %vm841, %v843, %v839
      %v845 = vmul.f32 1.0, %v844
      %v846 = vrcp.pop %v830
      %v847 = vmul.f32 %v830, %v846
      %v848 = vsub.f32 1.0, %v847
      %v849 = vmul.f32 %v846, %v848
      %v850 = vadd.f32 %v846, %v849
      %vm851 = vweird.f32 %v830
      %vm852 = vweird.f32 %v846
      %vm853 = vmor %vm851, %vm852
      %v854 = vsel %vm853, %v846, %v850
      %v855 = vand.u32 2147483647, %v830
      %vm856 = vcmp.eq.f32.partialorder %v855, 8.507059e+37
      %v857 = vand.u32 %v830, 2147483648
      %v858 = vor.u32 1.1754944e-38, %v857
      %v859 = vsel %vm856, %v858, %v854
      %v860 = vmul.f32 1.0, %v859
      %863 = vrot.lane.b32.xlu0 %v807, 120
      %v864 = vpop.permute.xlu0 %863
      %865 = vrot.lane.b32.xlu0 %v822, 120
      %v866 = vpop.permute.xlu0 %865
      %871 = vrot.lane.b32.xlu0 %v845, 120
      %v872 = vpop.permute.xlu0 %871
      %873 = vrot.lane.b32.xlu0 %v860, 120
      %v874 = vpop.permute.xlu0 %873
      %vm877 = vcmask 982016
      %v878 = vsel %vm877, %v599, %v864
      %v879 = vsel %vm877, %v601, %v866
      %vm880 = vcmask 1014784
      %v881 = vsel %vm880, %v878, %v872
      %v882 = vsel %vm880, %v879, %v874
      %883 = vst [vmem:[%s556] sm:$0xff] %v881
      %884 = vst [vmem:[%s556 + $0x8] sm:$0xff] %v882
      %p885 = scmp.lt.s32.totalorder %s22, 5
      %s886 = scalar_select %p885, %s22, 5
      %s887 = smul.addr %s886, 2
      %s888 = smul.addr %s887, 8
      %s889 = scalar_lea.vmem %s11, %s888
      // Predicated region
      $region65: #{detrhoi_forward.3} parent=63 // pred_check
        %p890 = pneg %p326
      $region66: #{detrhoi_forward.3} parent=63 // pred_check_branch
        %892 = sbr.rel (%p890) target = $region68
      $region67: #{detrhoi_forward.3} parent=63 // pred_region
        _
      $region68: #{detrhoi_forward.3} parent=63 // pred_fallthru
        _
    $region64: #{detrhoi_forward.3} parent=5 // pred_fallthru
      _
    %p893 = scmp.le.s32.totalorder 2, %s17
    // Predicated region
    $region69: #{detrhoi_forward.3} parent=5 // pred_check
      %p894 = pneg %p893
    $region70: #{detrhoi_forward.3} parent=5 // pred_check_branch
      %896 = sbr.rel (%p894) target = $region72
    $region71: #{detrhoi_forward.3} parent=5 // pred_region
      %s897 = ssub.s32 %s17, 2
      // Predicated region
      $region73: #{detrhoi_forward.3} parent=71 // pred_check
        %p898 = pneg %p332
      $region74: #{detrhoi_forward.3} parent=71 // pred_check_branch
        %900 = sbr.rel (%p898) target = $region76
      $region75: #{detrhoi_forward.3} parent=71 // pred_region
        %p901 = scmp.lt.s32.totalorder %s23, 5
        %s902 = scalar_select %p901, %s23, 5
        %s903 = smul.addr %s902, 2
        %s904 = smul.addr %s903, 8
        %s905 = scalar_lea.vmem %s11, %s904
      $region76: #{detrhoi_forward.3} parent=71 // pred_fallthru
        _
    $region72: #{detrhoi_forward.3} parent=5 // pred_fallthru
      _
  $region6: #{detrhoi_forward.3} parent=0 // loop_footer
    %s21 = sadd.s32 1, %s17
  $region7: #{detrhoi_forward.3} parent=0 // loop_footer_branch
    %16 = sbr.rel target = $region3
  $region8: #{detrhoi_forward.3} parent=0 // loop_exit
    _

</llo_original>
